<compile_context>
chip_gen: v6e
topology: v6e:2x2x1
jax: 0.10.0
libtpu: 0.0.40
codegen_flags: <defaults>
</compile_context>

<pallas_src>
import math
import functools

import jax
import jax.numpy as jnp
from jax import lax
from jax.experimental import pallas as pl
from jax.experimental.pallas import tpu as pltpu


# ------------------------- shared elementwise helpers -------------------------
def _layernorm(v, w, b, eps=1e-5):
    mu = jnp.mean(v, axis=-1, keepdims=True)
    var = jnp.mean((v - mu) ** 2, axis=-1, keepdims=True)
    return (v - mu) * lax.rsqrt(var + eps) * w + b


def _new_gelu(x):
    c = math.sqrt(2.0 / math.pi)
    return 0.5 * x * (1.0 + jnp.tanh(c * (x + 0.044715 * x * x * x)))


# --------------------------------- kernels ------------------------------------
def qkv_kernel(x_ref, ln1w_ref, ln1b_ref, wqkv_ref, bqkv_ref,
               q_ref, k_ref, v_ref):
    """LN1 + fused QKV projection for one (batch, row-tile)."""
    x = x_ref[0]                                    # (tq, C) f32
    C = x.shape[-1]
    h = _layernorm(x, ln1w_ref[0], ln1b_ref[0])     # f32 elementwise
    qkv = jnp.dot(h.astype(jnp.bfloat16), wqkv_ref[...],
                  preferred_element_type=jnp.float32) + bqkv_ref[0]
    # q already carries the 1/sqrt(hd) scale (folded into the weights on host).
    q_ref[0] = qkv[:, :C].astype(jnp.bfloat16)
    k_ref[0] = qkv[:, C:2 * C].astype(jnp.bfloat16)
    v_ref[0] = qkv[:, 2 * C:].astype(jnp.bfloat16)


def attn_mlp_kernel(x_ref, q_ref, k_ref, v_ref,
                    wap_ref, bap_ref, ln2w_ref, ln2b_ref,
                    wfc_ref, bfc_ref, wmp_ref, bmp_ref,
                    o_ref, *, n_head):
    """Causal attention + out-proj + residual + LN2 + GELU MLP + residual."""
    x = x_ref[0]                                    # (tq, C) f32
    tq, C = x.shape
    T = k_ref.shape[1]
    hd = C // n_head

    q = q_ref[0]                                    # (tq, C) bf16, pre-scaled
    k = k_ref[0]                                    # (T,  C) bf16
    v = v_ref[0]                                    # (T,  C) bf16

    # Causal mask for this query row tile (global row index = qi*tq + local).
    q_row0 = pl.program_id(1) * tq
    rows = q_row0 + lax.broadcasted_iota(jnp.int32, (tq, T), 0)
    cols = lax.broadcasted_iota(jnp.int32, (tq, T), 1)
    causal = cols <= rows

    # Per-head loop over contiguous lane slices: no (T,H,hd) reshape/transpose
    # relayouts and never a full (H, T, T) score tensor in VMEM.
    dimnums = (((1,), (1,)), ((), ()))              # contract head dim of q, k
    y_heads = []
    for h in range(n_head):
        sl = slice(h * hd, (h + 1) * hd)
        s = lax.dot_general(q[:, sl], k[:, sl], dimnums,
                            preferred_element_type=jnp.float32)   # (tq, T) f32
        s = jnp.where(causal, s, jnp.float32(-20.0))              # spec uses -20
        s = s - jnp.max(s, axis=-1, keepdims=True)
        p = jnp.exp(s)
        p = p * pl.reciprocal(jnp.sum(p, axis=-1, keepdims=True), approx=True)
        y_heads.append(jnp.dot(p.astype(jnp.bfloat16), v[:, sl],
                               preferred_element_type=jnp.float32))
    y = jnp.concatenate(y_heads, axis=-1)           # (tq, C) f32

    # Attention output projection + residual.
    y = jnp.dot(y.astype(jnp.bfloat16), wap_ref[...],
                preferred_element_type=jnp.float32) + bap_ref[0]
    x = x + y

    # MLP branch.
    h2 = _layernorm(x, ln2w_ref[0], ln2b_ref[0])
    f = jnp.dot(h2.astype(jnp.bfloat16), wfc_ref[...],
                preferred_element_type=jnp.float32) + bfc_ref[0]
    f = _new_gelu(f)
    f = jnp.dot(f.astype(jnp.bfloat16), wmp_ref[...],
                preferred_element_type=jnp.float32) + bmp_ref[0]

    o_ref[0] = x + f


# --------------------------------- wrapper ------------------------------------
_VMEM_LIMIT = 56 * 1024 * 1024   # leaves headroom on v7x (64 MiB physical)


def _block_forward_impl(x, params, n_head, tq, single_buffer):
    B, T, C = x.shape
    hd = C // n_head
    (ln1w, ln1b, wqkv, bqkv, wap, bap, ln2w, ln2b, wfc, bfc, wmp, bmp) = params

    # Fold the 1/sqrt(hd) attention scale into the q-columns of the QKV proj.
    scale = 1.0 / math.sqrt(hd)
    wqkv = wqkv.at[:, :C].multiply(scale)
    bqkv = bqkv.at[:, :C].multiply(scale)

    # bf16 weights for the MXU; biases / LN params stay f32.
    wqkv_b = wqkv.astype(jnp.bfloat16)
    wap_b = wap.astype(jnp.bfloat16)
    wfc_b = wfc.astype(jnp.bfloat16)
    wmp_b = wmp.astype(jnp.bfloat16)

    nq = T // tq
    grid = (B, nq)

    def const_spec(shape):
        imap = lambda b, i: (0,) * len(shape)
        if single_buffer:
            return pl.BlockSpec(shape, imap, pipeline_mode=pl.Buffered(1))
        return pl.BlockSpec(shape, imap)

    row_spec = pl.BlockSpec((1, tq, C), lambda b, i: (b, i, 0))
    seq_spec = pl.BlockSpec((1, T, C), lambda b, i: (b, 0, 0))

    cparams = pltpu.CompilerParams(
        dimension_semantics=("parallel", "parallel"),
        vmem_limit_bytes=_VMEM_LIMIT)

    # ---- pass 1: LN1 + QKV projection ----
    qkv_cost = pl.CostEstimate(
        flops=2 * B * T * C * 3 * C,
        transcendentals=B * T,
        bytes_accessed=B * T * C * 4 + C * 3 * C * 2 + 3 * B * T * C * 2)

    q, k, v = pl.pallas_call(
        qkv_kernel,
        out_shape=(jax.ShapeDtypeStruct((B, T, C), jnp.bfloat16),) * 3,
        grid=grid,
        in_specs=[row_spec,
                  const_spec((1, C)), const_spec((1, C)),
                  const_spec((C, 3 * C)), const_spec((1, 3 * C))],
        out_specs=(row_spec, row_spec, row_spec),
        compiler_params=cparams,
        cost_estimate=qkv_cost,
    )(x, ln1w, ln1b, wqkv_b, bqkv)

    # ---- pass 2: attention + projection + residual + MLP + residual ----
    attn_cost = pl.CostEstimate(
        flops=(4 * B * n_head * T * T * hd
               + 2 * B * T * C * C
               + 4 * B * T * C * 4 * C),
        transcendentals=B * n_head * T * T + B * T * 4 * C,
        bytes_accessed=(2 * B * T * C * 4
                        + B * T * C * 2
                        + 2 * B * nq * T * C * 2
                        + (C * C + 8 * C * C) * 2))

    out = pl.pallas_call(
        functools.partial(attn_mlp_kernel, n_head=n_head),
        out_shape=jax.ShapeDtypeStruct((B, T, C), jnp.float32),
        grid=grid,
        in_specs=[row_spec,                                   # x (residual)
                  row_spec,                                   # q tile (bf16)
                  seq_spec, seq_spec,                         # k, v full sequence
                  const_spec((C, C)), const_spec((1, C)),     # attn c_proj
                  const_spec((1, C)), const_spec((1, C)),     # ln2 w, b
                  const_spec((C, 4 * C)), const_spec((1, 4 * C)),   # mlp c_fc
                  const_spec((4 * C, C)), const_spec((1, C))],      # mlp c_proj
        out_specs=row_spec,
        compiler_params=cparams,
        cost_estimate=attn_cost,
    )(x, q, k, v, wap_b, bap, ln2w, ln2b, wfc_b, bfc, wmp_b, bmp)

    return out


def block_forward(x, params, n_head, tq=None):
    B, T, C = x.shape
    assert C % n_head == 0
    if tq is None:
        tq = min(T, 128)
    assert T % tq == 0
    try:
        return _block_forward_impl(x, params, n_head, tq, single_buffer=True)
    except Exception:
        # Some Pallas versions reject pl.Buffered(1) on pallas_call BlockSpecs;
        # retry with default (double-buffered) weight specs.
        return _block_forward_impl(x, params, n_head, tq, single_buffer=False)


# ---------------- pure-JAX reference (for verification) ----------------
def block_reference(x, params, n_head):
    (ln1w, ln1b, wqkv, bqkv, wap, bap, ln2w, ln2b, wfc, bfc, wmp, bmp) = params
    B, T, C = x.shape
    hd = C // n_head

    h = _layernorm(x, ln1w[0], ln1b[0])
    qkv = h @ wqkv + bqkv[0]
    q, k, v = jnp.split(qkv, 3, axis=-1)
    q = q.reshape(B, T, n_head, hd).transpose(0, 2, 1, 3)
    k = k.reshape(B, T, n_head, hd).transpose(0, 2, 1, 3)
    v = v.reshape(B, T, n_head, hd).transpose(0, 2, 1, 3)
    att = jnp.einsum('bhtd,bhsd->bhts', q, k) / math.sqrt(hd)
    mask = jnp.tril(jnp.ones((T, T), dtype=bool))
    att = jnp.where(mask[None, None], att, -20.0)
    att = jax.nn.softmax(att, axis=-1)
    y = jnp.einsum('bhts,bhsd->bhtd', att, v)
    y = y.transpose(0, 2, 1, 3).reshape(B, T, C)
    y = y @ wap + bap[0]
    x = x + y
    h2 = _layernorm(x, ln2w[0], ln2b[0])
    f = _new_gelu(h2 @ wfc + bfc[0])
    f = f @ wmp + bmp[0]
    return x + f


def init_params(key, C):
    ks = jax.random.split(key, 8)
    scale = 0.05
    ln1w = jnp.ones((1, C), jnp.float32)
    ln1b = jnp.zeros((1, C), jnp.float32)
    wqkv = scale * jax.random.normal(ks[0], (C, 3 * C), jnp.float32)
    bqkv = scale * jax.random.normal(ks[1], (1, 3 * C), jnp.float32)
    wap = scale * jax.random.normal(ks[2], (C, C), jnp.float32)
    bap = scale * jax.random.normal(ks[3], (1, C), jnp.float32)
    ln2w = jnp.ones((1, C), jnp.float32)
    ln2b = jnp.zeros((1, C), jnp.float32)
    wfc = scale * jax.random.normal(ks[4], (C, 4 * C), jnp.float32)
    bfc = scale * jax.random.normal(ks[5], (1, 4 * C), jnp.float32)
    wmp = scale * jax.random.normal(ks[6], (4 * C, C), jnp.float32)
    bmp = scale * jax.random.normal(ks[7], (1, C), jnp.float32)
    return (ln1w, ln1b, wqkv, bqkv, wap, bap, ln2w, ln2b, wfc, bfc, wmp, bmp)


if __name__ == "__main__":
    # Small, TPU-friendly (lane-dense) test shapes; tq=64 gives 2 row tiles so
    # the cross-tile causal masking path is exercised.
    B, T, C, H = 2, 128, 128, 4
    key = jax.random.PRNGKey(0)
    kx, kp = jax.random.split(key)
    x = jax.random.normal(kx, (B, T, C), jnp.float32)
    params = init_params(kp, C)

    out = jax.block_until_ready(block_forward(x, params, H, tq=64))

    ref = block_reference(x, params, H)
    assert out.shape == (B, T, C)
    # bf16 matmul operands + approx reciprocal => loose-ish tolerance vs f32 ref.
    assert jnp.allclose(out, ref, atol=5e-2, rtol=5e-2), "mismatch vs reference"
    print("KERNEL_OK")
</pallas_src>

<mosaic_0001>
module attributes {stable_mosaic.version = 11 : i64} {
  func.func @qkv_kernel(%arg0: i32, %arg1: i32, %arg2: memref<1x64x128xf32, #tpu.memory_space<vmem>>, %arg3: memref<1x128xf32, #tpu.memory_space<vmem>>, %arg4: memref<1x128xf32, #tpu.memory_space<vmem>>, %arg5: memref<128x384xbf16, #tpu.memory_space<vmem>>, %arg6: memref<1x384xf32, #tpu.memory_space<vmem>>, %arg7: memref<1x64x128xbf16, #tpu.memory_space<vmem>>, %arg8: memref<1x64x128xbf16, #tpu.memory_space<vmem>>, %arg9: memref<1x64x128xbf16, #tpu.memory_space<vmem>>) attributes {dimension_semantics = [#tpu.dimension_semantics<parallel>, #tpu.dimension_semantics<parallel>], iteration_bounds = array<i64: 2, 2>, scalar_prefetch = 0 : i64, scratch_operands = 0 : i64, tpu.core_type = #tpu.core_type<tc>, window_params = [{transform_indices = @transform_0, window_bounds = array<i64: 1, 64, 128>}, {pipeline_mode = #tpu.pipeline_mode<synchronous>, transform_indices = @transform_1, window_bounds = array<i64: 1, 128>}, {pipeline_mode = #tpu.pipeline_mode<synchronous>, transform_indices = @transform_2, window_bounds = array<i64: 1, 128>}, {pipeline_mode = #tpu.pipeline_mode<synchronous>, transform_indices = @transform_3, window_bounds = array<i64: 128, 384>}, {pipeline_mode = #tpu.pipeline_mode<synchronous>, transform_indices = @transform_4, window_bounds = array<i64: 1, 384>}, {transform_indices = @transform_5, window_bounds = array<i64: 1, 64, 128>}, {transform_indices = @transform_6, window_bounds = array<i64: 1, 64, 128>}, {transform_indices = @transform_7, window_bounds = array<i64: 1, 64, 128>}]} {
    %c0 = arith.constant 0 : index
    %c0_0 = arith.constant 0 : index
    %c0_1 = arith.constant 0 : index
    %0 = vector.load %arg2[%c0, %c0_0, %c0_1] : memref<1x64x128xf32, #tpu.memory_space<vmem>>, vector<1x64x128xf32>
    %1 = vector.shape_cast %0 : vector<1x64x128xf32> to vector<64x128xf32>
    %c0_2 = arith.constant 0 : index
    %c0_3 = arith.constant 0 : index
    %2 = vector.load %arg3[%c0_2, %c0_3] : memref<1x128xf32, #tpu.memory_space<vmem>>, vector<1x128xf32>
    %3 = vector.shape_cast %2 : vector<1x128xf32> to vector<128xf32>
    %c0_4 = arith.constant 0 : index
    %c0_5 = arith.constant 0 : index
    %4 = vector.load %arg4[%c0_4, %c0_5] : memref<1x128xf32, #tpu.memory_space<vmem>>, vector<1x128xf32>
    %5 = vector.shape_cast %4 : vector<1x128xf32> to vector<128xf32>
    %cst = arith.constant dense<0.000000e+00> : vector<64xf32>
    %6 = vector.multi_reduction <add>, %1, %cst [1] : vector<64x128xf32> to vector<64xf32>
    %7 = vector.shape_cast %6 : vector<64xf32> to vector<64x1xf32>
    %cst_6 = arith.constant 1.280000e+02 : f32
    %8 = vector.broadcast %cst_6 : f32 to vector<64x1xf32>
    %9 = arith.divf %7, %8 : vector<64x1xf32>
    %10 = vector.broadcast %9 : vector<64x1xf32> to vector<64x128xf32>
    %11 = arith.subf %1, %10 : vector<64x128xf32>
    %12 = arith.mulf %11, %11 : vector<64x128xf32>
    %cst_7 = arith.constant dense<0.000000e+00> : vector<64xf32>
    %13 = vector.multi_reduction <add>, %12, %cst_7 [1] : vector<64x128xf32> to vector<64xf32>
    %14 = vector.shape_cast %13 : vector<64xf32> to vector<64x1xf32>
    %cst_8 = arith.constant 1.280000e+02 : f32
    %15 = vector.broadcast %cst_8 : f32 to vector<64x1xf32>
    %16 = arith.divf %14, %15 : vector<64x1xf32>
    %17 = vector.broadcast %9 : vector<64x1xf32> to vector<64x128xf32>
    %18 = arith.subf %1, %17 : vector<64x128xf32>
    %cst_9 = arith.constant 9.99999974E-6 : f32
    %19 = vector.broadcast %cst_9 : f32 to vector<64x1xf32>
    %20 = arith.addf %16, %19 : vector<64x1xf32>
    %21 = math.rsqrt %20 : vector<64x1xf32>
    %22 = vector.broadcast %21 : vector<64x1xf32> to vector<64x128xf32>
    %23 = arith.mulf %18, %22 : vector<64x128xf32>
    %24 = vector.shape_cast %3 : vector<128xf32> to vector<1x128xf32>
    %25 = vector.broadcast %24 : vector<1x128xf32> to vector<64x128xf32>
    %26 = arith.mulf %23, %25 : vector<64x128xf32>
    %27 = vector.shape_cast %5 : vector<128xf32> to vector<1x128xf32>
    %28 = vector.broadcast %27 : vector<1x128xf32> to vector<64x128xf32>
    %29 = arith.addf %26, %28 : vector<64x128xf32>
    %30 = arith.truncf %29 : vector<64x128xf32> to vector<64x128xbf16>
    %c0_10 = arith.constant 0 : index
    %c0_11 = arith.constant 0 : index
    %31 = vector.load %arg5[%c0_10, %c0_11] : memref<128x384xbf16, #tpu.memory_space<vmem>>, vector<128x384xbf16>
    %cst_12 = arith.constant dense<0.000000e+00> : vector<64x384xf32>
    %32 = tpu.matmul %30, %31, %cst_12 {dimension_numbers = #tpu.dot_dimension_numbers<[1], [0], [0], [1], [0, 0, 1, 1], [], []>} : vector<64x128xbf16>, vector<128x384xbf16>, vector<64x384xf32> -> vector<64x384xf32>
    %c0_13 = arith.constant 0 : index
    %c0_14 = arith.constant 0 : index
    %33 = vector.load %arg6[%c0_13, %c0_14] : memref<1x384xf32, #tpu.memory_space<vmem>>, vector<1x384xf32>
    %34 = vector.shape_cast %33 : vector<1x384xf32> to vector<384xf32>
    %35 = vector.shape_cast %34 : vector<384xf32> to vector<1x384xf32>
    %36 = vector.broadcast %35 : vector<1x384xf32> to vector<64x384xf32>
    %37 = arith.addf %32, %36 : vector<64x384xf32>
    %38 = vector.extract_strided_slice %37 {offsets = [0, 0], sizes = [64, 128], strides = [1, 1]} : vector<64x384xf32> to vector<64x128xf32>
    %39 = arith.truncf %38 : vector<64x128xf32> to vector<64x128xbf16>
    %c0_15 = arith.constant 0 : index
    %c0_16 = arith.constant 0 : index
    %c0_17 = arith.constant 0 : index
    %40 = vector.load %arg7[%c0_15, %c0_16, %c0_17] : memref<1x64x128xbf16, #tpu.memory_space<vmem>>, vector<1x64x128xbf16>
    %41 = vector.shape_cast %40 : vector<1x64x128xbf16> to vector<64x128xbf16>
    %42 = vector.shape_cast %39 : vector<64x128xbf16> to vector<1x64x128xbf16>
    tpu.vector_store %arg7[%c0_15, %c0_16, %c0_17], %42 {strides = array<i32>} : memref<1x64x128xbf16, #tpu.memory_space<vmem>>, vector<1x64x128xbf16>,
    %43 = vector.extract_strided_slice %37 {offsets = [0, 128], sizes = [64, 128], strides = [1, 1]} : vector<64x384xf32> to vector<64x128xf32>
    %44 = arith.truncf %43 : vector<64x128xf32> to vector<64x128xbf16>
    %c0_18 = arith.constant 0 : index
    %c0_19 = arith.constant 0 : index
    %c0_20 = arith.constant 0 : index
    %45 = vector.load %arg8[%c0_18, %c0_19, %c0_20] : memref<1x64x128xbf16, #tpu.memory_space<vmem>>, vector<1x64x128xbf16>
    %46 = vector.shape_cast %45 : vector<1x64x128xbf16> to vector<64x128xbf16>
    %47 = vector.shape_cast %44 : vector<64x128xbf16> to vector<1x64x128xbf16>
    tpu.vector_store %arg8[%c0_18, %c0_19, %c0_20], %47 {strides = array<i32>} : memref<1x64x128xbf16, #tpu.memory_space<vmem>>, vector<1x64x128xbf16>,
    %48 = vector.extract_strided_slice %37 {offsets = [0, 256], sizes = [64, 128], strides = [1, 1]} : vector<64x384xf32> to vector<64x128xf32>
    %49 = arith.truncf %48 : vector<64x128xf32> to vector<64x128xbf16>
    %c0_21 = arith.constant 0 : index
    %c0_22 = arith.constant 0 : index
    %c0_23 = arith.constant 0 : index
    %50 = vector.load %arg9[%c0_21, %c0_22, %c0_23] : memref<1x64x128xbf16, #tpu.memory_space<vmem>>, vector<1x64x128xbf16>
    %51 = vector.shape_cast %50 : vector<1x64x128xbf16> to vector<64x128xbf16>
    %52 = vector.shape_cast %49 : vector<64x128xbf16> to vector<1x64x128xbf16>
    tpu.vector_store %arg9[%c0_21, %c0_22, %c0_23], %52 {strides = array<i32>} : memref<1x64x128xbf16, #tpu.memory_space<vmem>>, vector<1x64x128xbf16>,
    return
  }
  func.func @transform_0(%arg0: i32, %arg1: i32) -> (i32, i32, i32) {
    %c0_i32 = arith.constant 0 : i32
    %c0_i32_0 = arith.constant 0 : i32
    return %arg0, %arg1, %c0_i32 : i32, i32, i32
  }
  func.func @transform_1(%arg0: i32, %arg1: i32) -> (i32, i32) {
    %c0_i32 = arith.constant 0 : i32
    %c0_i32_0 = arith.constant 0 : i32
    %c0_i32_1 = arith.constant 0 : i32
    return %c0_i32, %c0_i32_0 : i32, i32
  }
  func.func @transform_2(%arg0: i32, %arg1: i32) -> (i32, i32) {
    %c0_i32 = arith.constant 0 : i32
    %c0_i32_0 = arith.constant 0 : i32
    %c0_i32_1 = arith.constant 0 : i32
    return %c0_i32, %c0_i32_0 : i32, i32
  }
  func.func @transform_3(%arg0: i32, %arg1: i32) -> (i32, i32) {
    %c0_i32 = arith.constant 0 : i32
    %c0_i32_0 = arith.constant 0 : i32
    %c0_i32_1 = arith.constant 0 : i32
    return %c0_i32, %c0_i32_0 : i32, i32
  }
  func.func @transform_4(%arg0: i32, %arg1: i32) -> (i32, i32) {
    %c0_i32 = arith.constant 0 : i32
    %c0_i32_0 = arith.constant 0 : i32
    %c0_i32_1 = arith.constant 0 : i32
    return %c0_i32, %c0_i32_0 : i32, i32
  }
  func.func @transform_5(%arg0: i32, %arg1: i32) -> (i32, i32, i32) {
    %c0_i32 = arith.constant 0 : i32
    %c0_i32_0 = arith.constant 0 : i32
    return %arg0, %arg1, %c0_i32 : i32, i32, i32
  }
  func.func @transform_6(%arg0: i32, %arg1: i32) -> (i32, i32, i32) {
    %c0_i32 = arith.constant 0 : i32
    %c0_i32_0 = arith.constant 0 : i32
    return %arg0, %arg1, %c0_i32 : i32, i32, i32
  }
  func.func @transform_7(%arg0: i32, %arg1: i32) -> (i32, i32, i32) {
    %c0_i32 = arith.constant 0 : i32
    %c0_i32_0 = arith.constant 0 : i32
    return %arg0, %arg1, %c0_i32 : i32, i32, i32
  }
}

module attributes {stable_mosaic.version = 11 : i64} {
  func.func @qkv_kernel(%arg0: i32, %arg1: i32, %arg2: memref<1x64x128xf32, #tpu.memory_space<vmem>>, %arg3: memref<1x128xf32, #tpu.memory_space<vmem>>, %arg4: memref<1x128xf32, #tpu.memory_space<vmem>>, %arg5: memref<128x384xbf16, #tpu.memory_space<vmem>>, %arg6: memref<1x384xf32, #tpu.memory_space<vmem>>, %arg7: memref<1x64x128xbf16, #tpu.memory_space<vmem>>, %arg8: memref<1x64x128xbf16, #tpu.memory_space<vmem>>, %arg9: memref<1x64x128xbf16, #tpu.memory_space<vmem>>) attributes {dimension_semantics = [#tpu.dimension_semantics<parallel>, #tpu.dimension_semantics<parallel>], iteration_bounds = array<i64: 2, 2>, scalar_prefetch = 0 : i64, scratch_operands = 0 : i64, tpu.core_type = #tpu.core_type<tc>, window_params = [{transform_indices = @transform_0, window_bounds = array<i64: 1, 64, 128>}, {pipeline_mode = #tpu.pipeline_mode<synchronous>, transform_indices = @transform_1, window_bounds = array<i64: 1, 128>}, {pipeline_mode = #tpu.pipeline_mode<synchronous>, transform_indices = @transform_2, window_bounds = array<i64: 1, 128>}, {pipeline_mode = #tpu.pipeline_mode<synchronous>, transform_indices = @transform_3, window_bounds = array<i64: 128, 384>}, {pipeline_mode = #tpu.pipeline_mode<synchronous>, transform_indices = @transform_4, window_bounds = array<i64: 1, 384>}, {transform_indices = @transform_5, window_bounds = array<i64: 1, 64, 128>}, {transform_indices = @transform_6, window_bounds = array<i64: 1, 64, 128>}, {transform_indices = @transform_7, window_bounds = array<i64: 1, 64, 128>}]} {
    %c0 = arith.constant 0 : index
    %c0_0 = arith.constant 0 : index
    %c0_1 = arith.constant 0 : index
    %0 = vector.load %arg2[%c0, %c0_0, %c0_1] : memref<1x64x128xf32, #tpu.memory_space<vmem>>, vector<1x64x128xf32>
    %1 = vector.shape_cast %0 : vector<1x64x128xf32> to vector<64x128xf32>
    %c0_2 = arith.constant 0 : index
    %c0_3 = arith.constant 0 : index
    %2 = vector.load %arg3[%c0_2, %c0_3] : memref<1x128xf32, #tpu.memory_space<vmem>>, vector<1x128xf32>
    %3 = vector.shape_cast %2 : vector<1x128xf32> to vector<128xf32>
    %c0_4 = arith.constant 0 : index
    %c0_5 = arith.constant 0 : index
    %4 = vector.load %arg4[%c0_4, %c0_5] : memref<1x128xf32, #tpu.memory_space<vmem>>, vector<1x128xf32>
    %5 = vector.shape_cast %4 : vector<1x128xf32> to vector<128xf32>
    %cst = arith.constant dense<0.000000e+00> : vector<64xf32>
    %6 = vector.multi_reduction <add>, %1, %cst [1] : vector<64x128xf32> to vector<64xf32>
    %7 = vector.shape_cast %6 : vector<64xf32> to vector<64x1xf32>
    %cst_6 = arith.constant 1.280000e+02 : f32
    %8 = vector.broadcast %cst_6 : f32 to vector<64x1xf32>
    %9 = arith.divf %7, %8 : vector<64x1xf32>
    %10 = vector.broadcast %9 : vector<64x1xf32> to vector<64x128xf32>
    %11 = arith.subf %1, %10 : vector<64x128xf32>
    %12 = arith.mulf %11, %11 : vector<64x128xf32>
    %cst_7 = arith.constant dense<0.000000e+00> : vector<64xf32>
    %13 = vector.multi_reduction <add>, %12, %cst_7 [1] : vector<64x128xf32> to vector<64xf32>
    %14 = vector.shape_cast %13 : vector<64xf32> to vector<64x1xf32>
    %cst_8 = arith.constant 1.280000e+02 : f32
    %15 = vector.broadcast %cst_8 : f32 to vector<64x1xf32>
    %16 = arith.divf %14, %15 : vector<64x1xf32>
    %17 = vector.broadcast %9 : vector<64x1xf32> to vector<64x128xf32>
    %18 = arith.subf %1, %17 : vector<64x128xf32>
    %cst_9 = arith.constant 9.99999974E-6 : f32
    %19 = vector.broadcast %cst_9 : f32 to vector<64x1xf32>
    %20 = arith.addf %16, %19 : vector<64x1xf32>
    %21 = math.rsqrt %20 : vector<64x1xf32>
    %22 = vector.broadcast %21 : vector<64x1xf32> to vector<64x128xf32>
    %23 = arith.mulf %18, %22 : vector<64x128xf32>
    %24 = vector.shape_cast %3 : vector<128xf32> to vector<1x128xf32>
    %25 = vector.broadcast %24 : vector<1x128xf32> to vector<64x128xf32>
    %26 = arith.mulf %23, %25 : vector<64x128xf32>
    %27 = vector.shape_cast %5 : vector<128xf32> to vector<1x128xf32>
    %28 = vector.broadcast %27 : vector<1x128xf32> to vector<64x128xf32>
    %29 = arith.addf %26, %28 : vector<64x128xf32>
    %30 = arith.truncf %29 : vector<64x128xf32> to vector<64x128xbf16>
    %c0_10 = arith.constant 0 : index
    %c0_11 = arith.constant 0 : index
    %31 = vector.load %arg5[%c0_10, %c0_11] : memref<128x384xbf16, #tpu.memory_space<vmem>>, vector<128x384xbf16>
    %cst_12 = arith.constant dense<0.000000e+00> : vector<64x384xf32>
    %32 = tpu.matmul %30, %31, %cst_12 {dimension_numbers = #tpu.dot_dimension_numbers<[1], [0], [0], [1], [0, 0, 1, 1], [], []>} : vector<64x128xbf16>, vector<128x384xbf16>, vector<64x384xf32> -> vector<64x384xf32>
    %c0_13 = arith.constant 0 : index
    %c0_14 = arith.constant 0 : index
    %33 = vector.load %arg6[%c0_13, %c0_14] : memref<1x384xf32, #tpu.memory_space<vmem>>, vector<1x384xf32>
    %34 = vector.shape_cast %33 : vector<1x384xf32> to vector<384xf32>
    %35 = vector.shape_cast %34 : vector<384xf32> to vector<1x384xf32>
    %36 = vector.broadcast %35 : vector<1x384xf32> to vector<64x384xf32>
    %37 = arith.addf %32, %36 : vector<64x384xf32>
    %38 = vector.extract_strided_slice %37 {offsets = [0, 0], sizes = [64, 128], strides = [1, 1]} : vector<64x384xf32> to vector<64x128xf32>
    %39 = arith.truncf %38 : vector<64x128xf32> to vector<64x128xbf16>
    %c0_15 = arith.constant 0 : index
    %c0_16 = arith.constant 0 : index
    %c0_17 = arith.constant 0 : index
    %40 = vector.load %arg7[%c0_15, %c0_16, %c0_17] : memref<1x64x128xbf16, #tpu.memory_space<vmem>>, vector<1x64x128xbf16>
    %41 = vector.shape_cast %40 : vector<1x64x128xbf16> to vector<64x128xbf16>
    %42 = vector.shape_cast %39 : vector<64x128xbf16> to vector<1x64x128xbf16>
    tpu.vector_store %arg7[%c0_15, %c0_16, %c0_17], %42 {strides = array<i32>} : memref<1x64x128xbf16, #tpu.memory_space<vmem>>, vector<1x64x128xbf16>,
    %43 = vector.extract_strided_slice %37 {offsets = [0, 128], sizes = [64, 128], strides = [1, 1]} : vector<64x384xf32> to vector<64x128xf32>
    %44 = arith.truncf %43 : vector<64x128xf32> to vector<64x128xbf16>
    %c0_18 = arith.constant 0 : index
    %c0_19 = arith.constant 0 : index
    %c0_20 = arith.constant 0 : index
    %45 = vector.load %arg8[%c0_18, %c0_19, %c0_20] : memref<1x64x128xbf16, #tpu.memory_space<vmem>>, vector<1x64x128xbf16>
    %46 = vector.shape_cast %45 : vector<1x64x128xbf16> to vector<64x128xbf16>
    %47 = vector.shape_cast %44 : vector<64x128xbf16> to vector<1x64x128xbf16>
    tpu.vector_store %arg8[%c0_18, %c0_19, %c0_20], %47 {strides = array<i32>} : memref<1x64x128xbf16, #tpu.memory_space<vmem>>, vector<1x64x128xbf16>,
    %48 = vector.extract_strided_slice %37 {offsets = [0, 256], sizes = [64, 128], strides = [1, 1]} : vector<64x384xf32> to vector<64x128xf32>
    %49 = arith.truncf %48 : vector<64x128xf32> to vector<64x128xbf16>
    %c0_21 = arith.constant 0 : index
    %c0_22 = arith.constant 0 : index
    %c0_23 = arith.constant 0 : index
    %50 = vector.load %arg9[%c0_21, %c0_22, %c0_23] : memref<1x64x128xbf16, #tpu.memory_space<vmem>>, vector<1x64x128xbf16>
    %51 = vector.shape_cast %50 : vector<1x64x128xbf16> to vector<64x128xbf16>
    %52 = vector.shape_cast %49 : vector<64x128xbf16> to vector<1x64x128xbf16>
    tpu.vector_store %arg9[%c0_21, %c0_22, %c0_23], %52 {strides = array<i32>} : memref<1x64x128xbf16, #tpu.memory_space<vmem>>, vector<1x64x128xbf16>,
    return
  }
  func.func @transform_0(%arg0: i32, %arg1: i32) -> (i32, i32, i32) {
    %c0_i32 = arith.constant 0 : i32
    %c0_i32_0 = arith.constant 0 : i32
    return %arg0, %arg1, %c0_i32 : i32, i32, i32
  }
  func.func @transform_1(%arg0: i32, %arg1: i32) -> (i32, i32) {
    %c0_i32 = arith.constant 0 : i32
    %c0_i32_0 = arith.constant 0 : i32
    %c0_i32_1 = arith.constant 0 : i32
    return %c0_i32, %c0_i32_0 : i32, i32
  }
  func.func @transform_2(%arg0: i32, %arg1: i32) -> (i32, i32) {
    %c0_i32 = arith.constant 0 : i32
    %c0_i32_0 = arith.constant 0 : i32
    %c0_i32_1 = arith.constant 0 : i32
    return %c0_i32, %c0_i32_0 : i32, i32
  }
  func.func @transform_3(%arg0: i32, %arg1: i32) -> (i32, i32) {
    %c0_i32 = arith.constant 0 : i32
    %c0_i32_0 = arith.constant 0 : i32
    %c0_i32_1 = arith.constant 0 : i32
    return %c0_i32, %c0_i32_0 : i32, i32
  }
  func.func @transform_4(%arg0: i32, %arg1: i32) -> (i32, i32) {
    %c0_i32 = arith.constant 0 : i32
    %c0_i32_0 = arith.constant 0 : i32
    %c0_i32_1 = arith.constant 0 : i32
    return %c0_i32, %c0_i32_0 : i32, i32
  }
  func.func @transform_5(%arg0: i32, %arg1: i32) -> (i32, i32, i32) {
    %c0_i32 = arith.constant 0 : i32
    %c0_i32_0 = arith.constant 0 : i32
    return %arg0, %arg1, %c0_i32 : i32, i32, i32
  }
  func.func @transform_6(%arg0: i32, %arg1: i32) -> (i32, i32, i32) {
    %c0_i32 = arith.constant 0 : i32
    %c0_i32_0 = arith.constant 0 : i32
    return %arg0, %arg1, %c0_i32 : i32, i32, i32
  }
  func.func @transform_7(%arg0: i32, %arg1: i32) -> (i32, i32, i32) {
    %c0_i32 = arith.constant 0 : i32
    %c0_i32_0 = arith.constant 0 : i32
    return %arg0, %arg1, %c0_i32 : i32, i32, i32
  }
}

</mosaic_0001>

<llo_original>
// kernel: tpu_custom_call.1
$region0: #{tpu_custom_call.1}
  #allocation0 [shape = 'u32[]', space=smem, size = 0x4, offset = 0x4, fixed_abs, tag = 'smem constant byte address 0x4 - core index']
  #allocation1 [shape = 'u32[144,128]{1,0:T(1,128)}', space=vmem, size = 0x12000, scoped, tag = 'internal scratch']
  %s0 = inlined_call_operand.hbm [shape: f32[2,128,128], index: 0, kind: input, shape index: {}]
  %s1 = inlined_call_operand.vmem [shape: f32[1,128], index: 1, kind: input, shape index: {}]
  %s2 = inlined_call_operand.vmem [shape: f32[1,128], index: 2, kind: input, shape index: {}]
  %s3 = inlined_call_operand.hbm [shape: bf16[128,384], index: 3, kind: input, shape index: {}]
  %s4 = inlined_call_operand.vmem [shape: f32[1,384], index: 4, kind: input, shape index: {}]
  %s5 = inlined_call_operand.hbm [shape: bf16[2,128,128], index: 5, kind: output, shape index: {0}]
  %s6 = inlined_call_operand.hbm [shape: bf16[2,128,128], index: 6, kind: output, shape index: {1}]
  %s7 = inlined_call_operand.hbm [shape: bf16[2,128,128], index: 7, kind: output, shape index: {2}]
  %8 = xla_tuple %s5, %s6, %s7
  %s9 = sld [smem:[#allocation0]]
  $region77: #{tpu_custom_call.1} parent=0
    _
  %s11 = ssub.s32 1, %s9
  %s12 = scalar_select 0, %s11, %s9
  $region1: #{tpu_custom_call.1} parent=0
    #allocation2 [shape = 'u8[65536]{0}', space=vmem, size = 0x10000, scoped, tag = 'input window, operand 0']
    #allocation3 [shape = 's32[2]{0}', space=sflag, size = 0x8, scoped, tag = 'scoped memory for tpu_custom_call.1']
    #allocation4 [shape = 's32[2]{0}', space=sflag, size = 0x8, scoped, tag = 'scoped memory for tpu_custom_call.1']
    #allocation5 [shape = 'u8[98304]{0}', space=vmem, size = 0x18000, scoped, tag = 'input window, operand 3, single buffered']
    #allocation6 [shape = 's32[1]{0}', space=sflag, size = 0x4, scoped, tag = 'scoped memory for tpu_custom_call.1']
    #allocation7 [shape = 'u8[32768]{0}', space=vmem, size = 0x8000, scoped, tag = 'output window, operand 0']
    #allocation8 [shape = 'u8[32768]{0}', space=vmem, size = 0x8000, scoped, tag = 'output window, operand 1']
    #allocation9 [shape = 's32[2]{0}', space=sflag, size = 0x8, scoped, tag = 'scoped memory for tpu_custom_call.1']
    #allocation10 [shape = 'u8[32768]{0}', space=vmem, size = 0x8000, scoped, tag = 'output window, operand 2']
    %13 = vsyncpa [#allocation3], 0
    %s14 = scalar_lea.sflag [#allocation3], 1
    %15 = vsyncpa %s14, 0
    %16 = vsyncpa [#allocation6], 0
    %17 = vsyncpa [#allocation4], 0
    %s18 = scalar_lea.sflag [#allocation4], 1
    %19 = vsyncpa %s18, 0
    %20 = vsyncpa [#allocation9], 0
    %s21 = scalar_lea.sflag [#allocation9], 1
    %22 = vsyncpa %s21, 0
    loop: start=0, step=1, limit=6
    $region2: #{tpu_custom_call.1} parent=1 // loop_pre_header
      _
    $region3: #{tpu_custom_call.1} parent=1 // loop_header
      %s24 = sphi 0, %s28
      %p25 = scmp.ge.s32.totalorder %s24, 6
      %s31 = sphi 0, %s43
      %s32 = sphi 0, %s39
      %s33 = sphi 0, %s31
      %s34 = sphi 0, %s32
      %s35 = sphi 0, %s33
      %s36 = sphi 0, %s34
      %s48 = sphi 0, %s50
      %s51 = sphi 0, %s48
      %s52 = sphi 0, %s51
      %s68 = sphi 0, %s52
      %s72 = sphi 0, %s72
      %s74 = sphi 0, %s72
      %s75 = sphi 0, %s74
      %s89 = sphi 0, %s75
      %s93 = sphi 0, %s93
      %s95 = sphi 0, %s93
      %s96 = sphi 0, %s95
      %s110 = sphi 0, %s96
      %s114 = sphi 0, %s114
      %s116 = sphi 0, %s114
      %s117 = sphi 0, %s116
      %s131 = sphi 0, %s117
      %s135 = sphi 0, %s135
      %s137 = sphi 0, %s135
      %s138 = sphi 0, %s137
      %s152 = sphi 0, %s138
      %s160 = sphi 0, %s162
      %s163 = sphi 0, %s160
      %s164 = sphi 0, %s163
      %s180 = sphi 0, %s164
      %s188 = sphi 0, %s190
      %s191 = sphi 0, %s188
      %s192 = sphi 0, %s191
      %s208 = sphi 0, %s192
      %s216 = sphi 0, %s218
      %s219 = sphi 0, %s216
      %s220 = sphi 0, %s219
      %s236 = sphi 0, %s220
    $region4: #{tpu_custom_call.1} parent=1 // loop_header_branch
      %27 = sbr.rel (%p25) target = $region8
    $region5: #{tpu_custom_call.1} parent=1 // loop_body
      %s29 = ssub.s32 %s24, 1
      %s30 = ssub.s32 %s24, 2
      %s37 = sadd.s32 1, %s32
      %p38 = scmp.ge.s32.totalorder %s37, 2
      %s39 = scalar_select %p38, 0, %s37
      %s40 = sadd.s32 1, %s31
      %s41 = scalar_select %p38, %s40, %s31
      %p42 = scmp.ge.s32.totalorder %s41, 2
      %s43 = scalar_select %p42, 0, %s41
      %s44 = ssub.s32 %s31, %s43
      %s45 = ssub.s32 %s32, %s39
      %s46 = sor.u32 %s44, %s45
      %p47 = scmp.eq.s32.totalorder %s46, 0
      %s49 = sadd.s32 %s48, 1
      %s50 = scalar_select %p47, %s48, %s49
      %p53 = pneg %p47
      %p54 = scmp.eq.s32.totalorder %s24, 3
      %p55 = por %p53, %p54
      %p56 = scmp.ne.s32.totalorder %s48, %s51
      %p57 = scmp.eq.s32.totalorder %s24, 0
      %p58 = por %p56, %p57
      %p59 = scmp.ne.s32.totalorder %s48, %s51
      %p60 = scmp.eq.s32.totalorder %s29, 3
      %p61 = por %p59, %p60
      %p62 = scmp.ne.s32.totalorder %s51, %s52
      %p63 = scmp.eq.s32.totalorder %s29, 0
      %p64 = por %p62, %p63
      %p65 = scmp.ne.s32.totalorder %s51, %s52
      %p66 = scmp.eq.s32.totalorder %s30, 3
      %p67 = por %p65, %p66
      %p69 = scmp.ne.s32.totalorder %s52, %s68
      %p70 = scmp.eq.s32.totalorder %s30, 0
      %p71 = por %p69, %p70
      %s73 = sadd.s32 %s72, 1
      %p76 = scmp.eq.s32.totalorder %s24, 3
      %p77 = scmp.ne.s32.totalorder %s72, %s74
      %p78 = scmp.eq.s32.totalorder %s24, 0
      %p79 = por %p77, %p78
      %p80 = scmp.ne.s32.totalorder %s72, %s74
      %p81 = scmp.eq.s32.totalorder %s29, 3
      %p82 = por %p80, %p81
      %p83 = scmp.ne.s32.totalorder %s74, %s75
      %p84 = scmp.eq.s32.totalorder %s29, 0
      %p85 = por %p83, %p84
      %p86 = scmp.ne.s32.totalorder %s74, %s75
      %p87 = scmp.eq.s32.totalorder %s30, 3
      %p88 = por %p86, %p87
      %p90 = scmp.ne.s32.totalorder %s75, %s89
      %p91 = scmp.eq.s32.totalorder %s30, 0
      %p92 = por %p90, %p91
      %s94 = sadd.s32 %s93, 1
      %p97 = scmp.eq.s32.totalorder %s24, 3
      %p98 = scmp.ne.s32.totalorder %s93, %s95
      %p99 = scmp.eq.s32.totalorder %s24, 0
      %p100 = por %p98, %p99
      %p101 = scmp.ne.s32.totalorder %s93, %s95
      %p102 = scmp.eq.s32.totalorder %s29, 3
      %p103 = por %p101, %p102
      %p104 = scmp.ne.s32.totalorder %s95, %s96
      %p105 = scmp.eq.s32.totalorder %s29, 0
      %p106 = por %p104, %p105
      %p107 = scmp.ne.s32.totalorder %s95, %s96
      %p108 = scmp.eq.s32.totalorder %s30, 3
      %p109 = por %p107, %p108
      %p111 = scmp.ne.s32.totalorder %s96, %s110
      %p112 = scmp.eq.s32.totalorder %s30, 0
      %p113 = por %p111, %p112
      %s115 = sadd.s32 %s114, 1
      %p118 = scmp.eq.s32.totalorder %s24, 3
      %p119 = scmp.ne.s32.totalorder %s114, %s116
      %p120 = scmp.eq.s32.totalorder %s24, 0
      %p121 = por %p119, %p120
      %p122 = scmp.ne.s32.totalorder %s114, %s116
      %p123 = scmp.eq.s32.totalorder %s29, 3
      %p124 = por %p122, %p123
      %p125 = scmp.ne.s32.totalorder %s116, %s117
      %p126 = scmp.eq.s32.totalorder %s29, 0
      %p127 = por %p125, %p126
      %p128 = scmp.ne.s32.totalorder %s116, %s117
      %p129 = scmp.eq.s32.totalorder %s30, 3
      %p130 = por %p128, %p129
      %p132 = scmp.ne.s32.totalorder %s117, %s131
      %p133 = scmp.eq.s32.totalorder %s30, 0
      %p134 = por %p132, %p133
      %s136 = sadd.s32 %s135, 1
      %p139 = scmp.eq.s32.totalorder %s24, 3
      %p140 = scmp.ne.s32.totalorder %s135, %s137
      %p141 = scmp.eq.s32.totalorder %s24, 0
      %p142 = por %p140, %p141
      %p143 = scmp.ne.s32.totalorder %s135, %s137
      %p144 = scmp.eq.s32.totalorder %s29, 3
      %p145 = por %p143, %p144
      %p146 = scmp.ne.s32.totalorder %s137, %s138
      %p147 = scmp.eq.s32.totalorder %s29, 0
      %p148 = por %p146, %p147
      %p149 = scmp.ne.s32.totalorder %s137, %s138
      %p150 = scmp.eq.s32.totalorder %s30, 3
      %p151 = por %p149, %p150
      %p153 = scmp.ne.s32.totalorder %s138, %s152
      %p154 = scmp.eq.s32.totalorder %s30, 0
      %p155 = por %p153, %p154
      %s156 = ssub.s32 %s31, %s43
      %s157 = ssub.s32 %s32, %s39
      %s158 = sor.u32 %s156, %s157
      %p159 = scmp.eq.s32.totalorder %s158, 0
      %s161 = sadd.s32 %s160, 1
      %s162 = scalar_select %p159, %s160, %s161
      %p165 = pneg %p159
      %p166 = scmp.eq.s32.totalorder %s24, 3
      %p167 = por %p165, %p166
      %p168 = scmp.ne.s32.totalorder %s160, %s163
      %p169 = scmp.eq.s32.totalorder %s24, 0
      %p170 = por %p168, %p169
      %p171 = scmp.ne.s32.totalorder %s160, %s163
      %p172 = scmp.eq.s32.totalorder %s29, 3
      %p173 = por %p171, %p172
      %p174 = scmp.ne.s32.totalorder %s163, %s164
      %p175 = scmp.eq.s32.totalorder %s29, 0
      %p176 = por %p174, %p175
      %p177 = scmp.ne.s32.totalorder %s163, %s164
      %p178 = scmp.eq.s32.totalorder %s30, 3
      %p179 = por %p177, %p178
      %p181 = scmp.ne.s32.totalorder %s164, %s180
      %p182 = scmp.eq.s32.totalorder %s30, 0
      %p183 = por %p181, %p182
      %s184 = ssub.s32 %s31, %s43
      %s185 = ssub.s32 %s32, %s39
      %s186 = sor.u32 %s184, %s185
      %p187 = scmp.eq.s32.totalorder %s186, 0
      %s189 = sadd.s32 %s188, 1
      %s190 = scalar_select %p187, %s188, %s189
      %p193 = pneg %p187
      %p194 = scmp.eq.s32.totalorder %s24, 3
      %p195 = por %p193, %p194
      %p196 = scmp.ne.s32.totalorder %s188, %s191
      %p197 = scmp.eq.s32.totalorder %s24, 0
      %p198 = por %p196, %p197
      %p199 = scmp.ne.s32.totalorder %s188, %s191
      %p200 = scmp.eq.s32.totalorder %s29, 3
      %p201 = por %p199, %p200
      %p202 = scmp.ne.s32.totalorder %s191, %s192
      %p203 = scmp.eq.s32.totalorder %s29, 0
      %p204 = por %p202, %p203
      %p205 = scmp.ne.s32.totalorder %s191, %s192
      %p206 = scmp.eq.s32.totalorder %s30, 3
      %p207 = por %p205, %p206
      %p209 = scmp.ne.s32.totalorder %s192, %s208
      %p210 = scmp.eq.s32.totalorder %s30, 0
      %p211 = por %p209, %p210
      %s212 = ssub.s32 %s31, %s43
      %s213 = ssub.s32 %s32, %s39
      %s214 = sor.u32 %s212, %s213
      %p215 = scmp.eq.s32.totalorder %s214, 0
      %s217 = sadd.s32 %s216, 1
      %s218 = scalar_select %p215, %s216, %s217
      %p221 = pneg %p215
      %p222 = scmp.eq.s32.totalorder %s24, 3
      %p223 = por %p221, %p222
      %p224 = scmp.ne.s32.totalorder %s216, %s219
      %p225 = scmp.eq.s32.totalorder %s24, 0
      %p226 = por %p224, %p225
      %p227 = scmp.ne.s32.totalorder %s216, %s219
      %p228 = scmp.eq.s32.totalorder %s29, 3
      %p229 = por %p227, %p228
      %p230 = scmp.ne.s32.totalorder %s219, %s220
      %p231 = scmp.eq.s32.totalorder %s29, 0
      %p232 = por %p230, %p231
      %p233 = scmp.ne.s32.totalorder %s219, %s220
      %p234 = scmp.eq.s32.totalorder %s30, 3
      %p235 = por %p233, %p234
      %p237 = scmp.ne.s32.totalorder %s220, %s236
      %p238 = scmp.eq.s32.totalorder %s30, 0
      %p239 = por %p237, %p238
      %p240 = scmp.le.s32.totalorder 1, %s24
      %p241 = scmp.lt.s32.totalorder %s24, 5
      %p242 = pnand %p240, %p241
      %p243 = pneg %p242
      // Predicated region
      $region9: #{tpu_custom_call.1} parent=5 // pred_check
        _
      $region10: #{tpu_custom_call.1} parent=5 // pred_check_branch
        %245 = sbr.rel (%p242) target = $region12
      $region11: #{tpu_custom_call.1} parent=5 // pred_region
        %s246 = ssub.s32 %s24, 1
        // Predicated region
        $region13: #{tpu_custom_call.1} parent=11 // pred_check
          %p247 = pneg %p85
        $region14: #{tpu_custom_call.1} parent=11 // pred_check_branch
          %249 = sbr.rel (%p247) target = $region16
        $region15: #{tpu_custom_call.1} parent=11 // pred_region
          _
        $region16: #{tpu_custom_call.1} parent=11 // pred_fallthru
          _
        // Predicated region
        $region17: #{tpu_custom_call.1} parent=11 // pred_check
          %p250 = pneg %p106
        $region18: #{tpu_custom_call.1} parent=11 // pred_check_branch
          %252 = sbr.rel (%p250) target = $region20
        $region19: #{tpu_custom_call.1} parent=11 // pred_region
          _
        $region20: #{tpu_custom_call.1} parent=11 // pred_fallthru
          _
        // Predicated region
        $region21: #{tpu_custom_call.1} parent=11 // pred_check
          %p253 = pneg %p127
        $region22: #{tpu_custom_call.1} parent=11 // pred_check_branch
          %255 = sbr.rel (%p253) target = $region24
        $region23: #{tpu_custom_call.1} parent=11 // pred_region
          %s257 = ssub.s32 3072, 3072
          %258 = vsyncadd [#allocation6], %s257
          %s259 = sshll.u32 [#allocation5], 4
          %s260 = int_to_ptr.vmem [resolvable:$true] %s259
          %265 = dma.hbm_to_vmem [thread:$0]  %s3, 3072, %s260, [#allocation6], 192, 192, 12
        $region24: #{tpu_custom_call.1} parent=11 // pred_fallthru
          _
        // Predicated region
        $region25: #{tpu_custom_call.1} parent=11 // pred_check
          %p266 = pneg %p148
        $region26: #{tpu_custom_call.1} parent=11 // pred_check_branch
          %268 = sbr.rel (%p266) target = $region28
        $region27: #{tpu_custom_call.1} parent=11 // pred_region
          _
        $region28: #{tpu_custom_call.1} parent=11 // pred_fallthru
          _
      $region12: #{tpu_custom_call.1} parent=5 // pred_fallthru
        _
      %p269 = scmp.lt.s32.totalorder %s24, 4
      // Predicated region
      $region29: #{tpu_custom_call.1} parent=5 // pred_check
        %p270 = pneg %p269
      $region30: #{tpu_custom_call.1} parent=5 // pred_check_branch
        %272 = sbr.rel (%p270) target = $region32
      $region31: #{tpu_custom_call.1} parent=5 // pred_region
        // Predicated region
        $region33: #{tpu_custom_call.1} parent=31 // pred_check
          %p273 = pneg %p58
        $region34: #{tpu_custom_call.1} parent=31 // pred_check_branch
          %275 = sbr.rel (%p273) target = $region36
        $region35: #{tpu_custom_call.1} parent=31 // pred_region
          %s276 = sand.u32 %s48, 1
          %s277 = scalar_lea.sflag [#allocation3], %s276
          %s278 = sand.u32 %s48, 1
          %s279 = smul.addr %s278, 64
          %s280 = scalar_lea.vmem [#allocation2], %s279
          %s281 = smul.u32 8, %s32
          %s283 = ssub.s32 1024, 1024
          %284 = vsyncadd %s277, %s283
          %s285 = smul.addr %s31, 16
          %s286 = sadd.s32 %s281, %s285
          %s287 = smul.addr %s286, 128
          %s288 = scalar_lea.hbm %s0, %s287
          %s289 = sshll.u32 %s280, 4
          %s290 = int_to_ptr.vmem [resolvable:$true] %s289
          %295 = dma.hbm_to_vmem [thread:$0]  %s288, 1024, %s290, %s277, 128, 128, 8
        $region36: #{tpu_custom_call.1} parent=31 // pred_fallthru
          _
      $region32: #{tpu_custom_call.1} parent=5 // pred_fallthru
        _
      %p296 = scmp.le.s32.totalorder 1, %s24
      %p297 = scmp.lt.s32.totalorder %s24, 5
      %p298 = pnand %p296, %p297
      %p299 = pneg %p298
      // Predicated region
      $region37: #{tpu_custom_call.1} parent=5 // pred_check
        _
      $region38: #{tpu_custom_call.1} parent=5 // pred_check_branch
        %301 = sbr.rel (%p298) target = $region40
      $region39: #{tpu_custom_call.1} parent=5 // pred_region
        %s302 = ssub.s32 %s24, 1
        %s303 = sand.u32 %s51, 1
        %s304 = scalar_lea.sflag [#allocation3], %s303
        %s305 = sand.u32 %s51, 1
        %s306 = smul.addr %s305, 64
        %s307 = scalar_lea.vmem [#allocation2], %s306
        // Predicated region
        $region41: #{tpu_custom_call.1} parent=39 // pred_check
          %p308 = pneg %p64
        $region42: #{tpu_custom_call.1} parent=39 // pred_check_branch
          %310 = sbr.rel (%p308) target = $region44
        $region43: #{tpu_custom_call.1} parent=39 // pred_region
          %311 = dma.done %s304, 1024
        $region44: #{tpu_custom_call.1} parent=39 // pred_fallthru
          _
        // Predicated region
        $region45: #{tpu_custom_call.1} parent=39 // pred_check
          %p312 = pneg %p127
        $region46: #{tpu_custom_call.1} parent=39 // pred_check_branch
          %314 = sbr.rel (%p312) target = $region48
        $region47: #{tpu_custom_call.1} parent=39 // pred_region
          %315 = dma.done [#allocation6], 3072
        $region48: #{tpu_custom_call.1} parent=39 // pred_fallthru
          _
        %s316 = sand.u32 %s51, 1
        %s317 = scalar_lea.sflag [#allocation3], %s316
        %s318 = sand.u32 %s51, 1
        %s319 = smul.addr %s318, 64
        %s320 = scalar_lea.vmem [#allocation2], %s319
        %p321 = pneg %p64
        %p322 = pneg %p61
        %p323 = pneg %p85
        %p324 = pneg %p82
        %p325 = pneg %p106
        %p326 = pneg %p103
        %p327 = pneg %p127
        %p328 = pneg %p124
        %p329 = pneg %p148
        %p330 = pneg %p145
        %p331 = pneg %p176
        %p332 = pneg %p173
        %s333 = sand.u32 %s163, 1
        %s334 = scalar_lea.sflag [#allocation4], %s333
        %s335 = sand.u32 %s163, 1
        %s336 = smul.addr %s335, 32
        %s337 = scalar_lea.vmem [#allocation7], %s336
        %p338 = pneg %p204
        %p339 = pneg %p201
        %s340 = sand.u32 %s29, 1
        %s341 = scalar_lea.sflag [#allocation9], %s340
        %s342 = sand.u32 %s191, 1
        %s343 = smul.addr %s342, 32
        %s344 = scalar_lea.vmem [#allocation8], %s343
        %p345 = pneg %p232
        %p346 = pneg %p229
        %s347 = sand.u32 %s29, 1
        %s348 = scalar_lea.sflag [#allocation9], %s347
        %s349 = sand.u32 %s219, 1
        %s350 = smul.addr %s349, 32
        %s351 = scalar_lea.vmem [#allocation10], %s350
        %s352 = smul.u32 8, %s34
        %s353 = smul.u32 8, %s34
        %s354 = smul.u32 8, %s34
        %s355 = smul.u32 8, %s34
        %v357 = vld [vmem:[%s307] sm:$0xff]
        %v358 = vld [vmem:[%s307 + $0x8] sm:$0xff]
        %v359 = vld [vmem:[%s307 + $0x10] sm:$0xff]
        %v360 = vld [vmem:[%s307 + $0x18] sm:$0xff]
        %v361 = vld [vmem:[%s307 + $0x20] sm:$0xff]
        %v362 = vld [vmem:[%s307 + $0x28] sm:$0xff]
        %v363 = vld [vmem:[%s307 + $0x30] sm:$0xff]
        %v364 = vld [vmem:[%s307 + $0x38] sm:$0xff]
        %v365 = vld [vmem:[%s1] sm:$0x1]
        %v366 = vld [vmem:[%s2] sm:$0x1]
        %367 = vadd.xlane.f32.xlu0 %v357
        %v368 = vpop.xlane.xlu0 %367
        %369 = vadd.xlane.f32.xlu0 %v358
        %v370 = vpop.xlane.xlu0 %369
        %371 = vadd.xlane.f32.xlu0 %v359
        %v372 = vpop.xlane.xlu0 %371
        %373 = vadd.xlane.f32.xlu0 %v360
        %v374 = vpop.xlane.xlu0 %373
        %375 = vadd.xlane.f32.xlu0 %v361
        %v376 = vpop.xlane.xlu0 %375
        %377 = vadd.xlane.f32.xlu0 %v362
        %v378 = vpop.xlane.xlu0 %377
        %379 = vadd.xlane.f32.xlu0 %v363
        %v380 = vpop.xlane.xlu0 %379
        %381 = vadd.xlane.f32.xlu0 %v364
        %v382 = vpop.xlane.xlu0 %381
        %v383 = vrcp.pop 128.0
        %v384 = vmul.f32 %v368, %v383
        %v385 = vmul.f32 %v370, %v383
        %v386 = vmul.f32 %v372, %v383
        %v387 = vmul.f32 %v374, %v383
        %v388 = vmul.f32 %v376, %v383
        %v389 = vmul.f32 %v378, %v383
        %v390 = vmul.f32 %v380, %v383
        %v391 = vmul.f32 %v382, %v383
        %v392 = vsub.f32 %v357, %v384
        %v393 = vsub.f32 %v358, %v385
        %v394 = vsub.f32 %v359, %v386
        %v395 = vsub.f32 %v360, %v387
        %v396 = vsub.f32 %v361, %v388
        %v397 = vsub.f32 %v362, %v389
        %v398 = vsub.f32 %v363, %v390
        %v399 = vsub.f32 %v364, %v391
        %v400 = vmul.f32 %v392, %v392
        %v401 = vmul.f32 %v393, %v393
        %v402 = vmul.f32 %v394, %v394
        %v403 = vmul.f32 %v395, %v395
        %v404 = vmul.f32 %v396, %v396
        %v405 = vmul.f32 %v397, %v397
        %v406 = vmul.f32 %v398, %v398
        %v407 = vmul.f32 %v399, %v399
        %408 = vadd.xlane.f32.xlu0 %v400
        %v409 = vpop.xlane.xlu0 %408
        %410 = vadd.xlane.f32.xlu0 %v401
        %v411 = vpop.xlane.xlu0 %410
        %412 = vadd.xlane.f32.xlu0 %v402
        %v413 = vpop.xlane.xlu0 %412
        %414 = vadd.xlane.f32.xlu0 %v403
        %v415 = vpop.xlane.xlu0 %414
        %416 = vadd.xlane.f32.xlu0 %v404
        %v417 = vpop.xlane.xlu0 %416
        %418 = vadd.xlane.f32.xlu0 %v405
        %v419 = vpop.xlane.xlu0 %418
        %420 = vadd.xlane.f32.xlu0 %v406
        %v421 = vpop.xlane.xlu0 %420
        %422 = vadd.xlane.f32.xlu0 %v407
        %v423 = vpop.xlane.xlu0 %422
        %v424 = vmul.f32 %v409, %v383
        %v425 = vmul.f32 %v411, %v383
        %v426 = vmul.f32 %v413, %v383
        %v427 = vmul.f32 %v415, %v383
        %v428 = vmul.f32 %v417, %v383
        %v429 = vmul.f32 %v419, %v383
        %v430 = vmul.f32 %v421, %v383
        %v431 = vmul.f32 %v423, %v383
        %v432 = vadd.f32 %v424, 1e-05
        %v433 = vadd.f32 %v425, 1e-05
        %v434 = vadd.f32 %v426, 1e-05
        %v435 = vadd.f32 %v427, 1e-05
        %v436 = vadd.f32 %v428, 1e-05
        %v437 = vadd.f32 %v429, 1e-05
        %v438 = vadd.f32 %v430, 1e-05
        %v439 = vadd.f32 %v431, 1e-05
        %v440 = vrsqrt.pop %v432
        %v441 = vrsqrt.pop %v433
        %v442 = vrsqrt.pop %v434
        %v443 = vrsqrt.pop %v435
        %v444 = vrsqrt.pop %v436
        %v445 = vrsqrt.pop %v437
        %v446 = vrsqrt.pop %v438
        %v447 = vrsqrt.pop %v439
        %v448 = vmul.f32 %v392, %v440
        %v449 = vmul.f32 %v393, %v441
        %v450 = vmul.f32 %v394, %v442
        %v451 = vmul.f32 %v395, %v443
        %v452 = vmul.f32 %v396, %v444
        %v453 = vmul.f32 %v397, %v445
        %v454 = vmul.f32 %v398, %v446
        %v455 = vmul.f32 %v399, %v447
        %v457 = vlaneseq
        %v458 = vshrl.u32 %v457, 7
        %v459 = vsub.s32 0, %v458
        %v460 = vrot.slane %v365, %v459
        %v462 = vmul.f32 %v448, %v460
        %v463 = vmul.f32 %v449, %v460
        %v464 = vmul.f32 %v450, %v460
        %v465 = vmul.f32 %v451, %v460
        %v466 = vmul.f32 %v452, %v460
        %v467 = vmul.f32 %v453, %v460
        %v468 = vmul.f32 %v454, %v460
        %v469 = vmul.f32 %v455, %v460
        %v471 = vlaneseq
        %v472 = vshrl.u32 %v471, 7
        %v473 = vsub.s32 0, %v472
        %v474 = vrot.slane %v366, %v473
        %v476 = vadd.f32 %v462, %v474
        %v477 = vadd.f32 %v463, %v474
        %v478 = vadd.f32 %v464, %v474
        %v479 = vadd.f32 %v465, %v474
        %v480 = vadd.f32 %v466, %v474
        %v481 = vadd.f32 %v467, %v474
        %v482 = vadd.f32 %v468, %v474
        %v483 = vadd.f32 %v469, %v474
        %v484 = vpack.c.bf16 %v477, %v476
        %v485 = vpack.c.bf16 %v479, %v478
        %v486 = vpack.c.bf16 %v481, %v480
        %v487 = vpack.c.bf16 %v483, %v482
        %v488 = vld [vmem:[#allocation5] sm:$0xff]
        %v489 = vld [vmem:[#allocation5 + $0x8] sm:$0xf]
        %v490 = vld [vmem:[#allocation5 + $0xc] sm:$0xff]
        %v491 = vld [vmem:[#allocation5 + $0x14] sm:$0xf]
        %v492 = vld [vmem:[#allocation5 + $0x18] sm:$0xff]
        %v493 = vld [vmem:[#allocation5 + $0x20] sm:$0xf]
        %v494 = vld [vmem:[#allocation5 + $0x24] sm:$0xff]
        %v495 = vld [vmem:[#allocation5 + $0x2c] sm:$0xf]
        %v496 = vld [vmem:[#allocation5 + $0x30] sm:$0xff]
        %v497 = vld [vmem:[#allocation5 + $0x38] sm:$0xf]
        %v498 = vld [vmem:[#allocation5 + $0x3c] sm:$0xff]
        %v499 = vld [vmem:[#allocation5 + $0x44] sm:$0xf]
        %v500 = vld [vmem:[#allocation5 + $0x48] sm:$0xff]
        %v501 = vld [vmem:[#allocation5 + $0x50] sm:$0xf]
        %v502 = vld [vmem:[#allocation5 + $0x54] sm:$0xff]
        %v503 = vld [vmem:[#allocation5 + $0x5c] sm:$0xf]
        %v504 = vld [vmem:[#allocation5 + $0x60] sm:$0xff]
        %v505 = vld [vmem:[#allocation5 + $0x68] sm:$0xf]
        %v506 = vld [vmem:[#allocation5 + $0x6c] sm:$0xff]
        %v507 = vld [vmem:[#allocation5 + $0x74] sm:$0xf]
        %v508 = vld [vmem:[#allocation5 + $0x78] sm:$0xff]
        %v509 = vld [vmem:[#allocation5 + $0x80] sm:$0xf]
        %v510 = vld [vmem:[#allocation5 + $0x84] sm:$0xff]
        %v511 = vld [vmem:[#allocation5 + $0x8c] sm:$0xf]
        %v512 = vld [vmem:[#allocation5 + $0x90] sm:$0xff]
        %v513 = vld [vmem:[#allocation5 + $0x98] sm:$0xf]
        %v514 = vld [vmem:[#allocation5 + $0x9c] sm:$0xff]
        %v515 = vld [vmem:[#allocation5 + $0xa4] sm:$0xf]
        %v516 = vld [vmem:[#allocation5 + $0xa8] sm:$0xff]
        %v517 = vld [vmem:[#allocation5 + $0xb0] sm:$0xf]
        %v518 = vld [vmem:[#allocation5 + $0xb4] sm:$0xff]
        %v519 = vld [vmem:[#allocation5 + $0xbc] sm:$0xf]
        %v520 = vld [vmem:[%s4] sm:$0x7]
        %v522 = vlaneseq
        %v523 = vshrl.u32 %v522, 7
        %v524 = vsub.s32 0, %v523
        %v525 = vrot.slane %v520, %v524
        %v526 = vlaneseq
        %v527 = vshrl.u32 %v526, 7
        %v528 = vsub.s32 1, %v527
        %v529 = vrot.slane %v520, %v528
        %v530 = vlaneseq
        %v531 = vshrl.u32 %v530, 7
        %v532 = vsub.s32 2, %v531
        %v533 = vrot.slane %v520, %v532
        %v569 = vunpack.c.l.b16 %v488
        %v570 = vunpack.c.h.b16 %v488
        %v571 = vunpack.c.l.b16 %v489
        %v572 = vunpack.c.l.b16 %v490
        %v573 = vunpack.c.h.b16 %v490
        %v574 = vunpack.c.l.b16 %v491
        %v575 = vunpack.c.l.b16 %v492
        %v576 = vunpack.c.h.b16 %v492
        %v577 = vunpack.c.l.b16 %v493
        %v578 = vunpack.c.l.b16 %v494
        %v579 = vunpack.c.h.b16 %v494
        %v580 = vunpack.c.l.b16 %v495
        %v581 = vunpack.c.l.b16 %v496
        %v582 = vunpack.c.h.b16 %v496
        %v583 = vunpack.c.l.b16 %v497
        %v584 = vunpack.c.l.b16 %v498
        %v585 = vunpack.c.h.b16 %v498
        %v586 = vunpack.c.l.b16 %v499
        %v587 = vunpack.c.l.b16 %v500
        %v588 = vunpack.c.h.b16 %v500
        %v589 = vunpack.c.l.b16 %v501
        %v590 = vunpack.c.l.b16 %v502
        %v591 = vunpack.c.h.b16 %v502
        %v592 = vunpack.c.l.b16 %v503
        %v593 = vunpack.c.l.b16 %v504
        %v594 = vunpack.c.h.b16 %v504
        %v595 = vunpack.c.l.b16 %v505
        %v596 = vunpack.c.l.b16 %v506
        %v597 = vunpack.c.h.b16 %v506
        %v598 = vunpack.c.l.b16 %v507
        %v599 = vunpack.c.l.b16 %v508
        %v600 = vunpack.c.h.b16 %v508
        %v601 = vunpack.c.l.b16 %v509
        %v602 = vunpack.c.l.b16 %v510
        %v603 = vunpack.c.h.b16 %v510
        %v604 = vunpack.c.l.b16 %v511
        %v605 = vunpack.c.l.b16 %v512
        %v606 = vunpack.c.h.b16 %v512
        %v607 = vunpack.c.l.b16 %v513
        %v608 = vunpack.c.l.b16 %v514
        %v609 = vunpack.c.h.b16 %v514
        %v610 = vunpack.c.l.b16 %v515
        %v611 = vunpack.c.l.b16 %v516
        %v612 = vunpack.c.h.b16 %v516
        %v613 = vunpack.c.l.b16 %v517
        %v614 = vunpack.c.l.b16 %v518
        %v615 = vunpack.c.h.b16 %v518
        %v616 = vunpack.c.l.b16 %v519
        %v617 = vpack.c.b16 %v572, %v569
        %v618 = vpack.c.b16 %v573, %v570
        %v619 = vpack.c.b16 %v574, %v571
        %v620 = vpack.c.b16 %v578, %v575
        %v621 = vpack.c.b16 %v579, %v576
        %v622 = vpack.c.b16 %v580, %v577
        %v623 = vpack.c.b16 %v584, %v581
        %v624 = vpack.c.b16 %v585, %v582
        %v625 = vpack.c.b16 %v586, %v583
        %v626 = vpack.c.b16 %v590, %v587
        %v627 = vpack.c.b16 %v591, %v588
        %v628 = vpack.c.b16 %v592, %v589
        %v629 = vpack.c.b16 %v596, %v593
        %v630 = vpack.c.b16 %v597, %v594
        %v631 = vpack.c.b16 %v598, %v595
        %v632 = vpack.c.b16 %v602, %v599
        %v633 = vpack.c.b16 %v603, %v600
        %v634 = vpack.c.b16 %v604, %v601
        %v635 = vpack.c.b16 %v608, %v605
        %v636 = vpack.c.b16 %v609, %v606
        %v637 = vpack.c.b16 %v610, %v607
        %v638 = vpack.c.b16 %v614, %v611
        %v639 = vpack.c.b16 %v615, %v612
        %v640 = vpack.c.b16 %v616, %v613
        %665 = vmatprep.subr.bf16.mxu0 %v639
        %666 = vmatpush1.bf16.msra.mxu0 %v638
        %667 = vmatprep.subr.bf16.mxu0 %v636
        %668 = vmatpush1.bf16.msra.mxu0 %v635
        %669 = vmatprep.subr.bf16.mxu0 %v633
        %670 = vmatpush1.bf16.msra.mxu0 %v632
        %671 = vmatprep.subr.bf16.mxu0 %v630
        %672 = vmatpush1.bf16.msra.mxu0 %v629
        %673 = vmatprep.subr.bf16.mxu0 %v627
        %674 = vmatpush1.bf16.msra.mxu0 %v626
        %675 = vmatprep.subr.bf16.mxu0 %v624
        %676 = vmatpush1.bf16.msra.mxu0 %v623
        %677 = vmatprep.subr.bf16.mxu0 %v621
        %678 = vmatpush1.bf16.msra.mxu0 %v620
        %679 = vmatprep.subr.bf16.mxu0 %v618
        %680 = vmatpush1.bf16.msra.mxu0 %v617
        %681 = vmatprep.subr.bf16.mxu0 0
        %682 = vmatpush2.bf16.msra.mxu0 0
        %683 = vmatprep.subr.bf16.mxu0 0
        %684 = vmatpush2.bf16.msra.mxu0 0
        %685 = vmatprep.subr.bf16.mxu0 0
        %686 = vmatpush2.bf16.msra.mxu0 0
        %687 = vmatprep.subr.bf16.mxu0 0
        %688 = vmatpush2.bf16.msra.mxu0 0
        %689 = vmatprep.subr.bf16.mxu0 0
        %690 = vmatpush2.bf16.msra.mxu0 0
        %691 = vmatprep.subr.bf16.mxu0 0
        %692 = vmatpush2.bf16.msra.mxu0 0
        %693 = vmatprep.subr.bf16.mxu0 0
        %694 = vmatpush2.bf16.msra.mxu0 0
        %695 = vmatprep.subr.bf16.mxu0 0
        %696 = vmatpush2.bf16.msra.mxu0 0
        %697 = vmatprep.mubr.bf16.mxu0 0
        %698 = vmatmul.mubr.bf16.gmra.mxu0 %v484
        %v699 = vpop.f32.mrf.mxu0
        %v700 = vadd.f32 %v525, %v699
        %v701 = vpop.f32.mrf.mxu0
        %v702 = vadd.f32 %v529, %v701
        %v703 = vpop.f32.mrf.mxu0
        %v704 = vadd.f32 %v525, %v703
        %v705 = vpop.f32.mrf.mxu0
        %v706 = vadd.f32 %v529, %v705
        %707 = vmatprep.mubr.bf16.mxu0 0
        %708 = vmatmul.mubr.bf16.gmra.mxu0 %v485
        %v709 = vpop.f32.mrf.mxu0
        %v710 = vadd.f32 %v525, %v709
        %v711 = vpop.f32.mrf.mxu0
        %v712 = vadd.f32 %v529, %v711
        %v713 = vpop.f32.mrf.mxu0
        %v714 = vadd.f32 %v525, %v713
        %v715 = vpop.f32.mrf.mxu0
        %v716 = vadd.f32 %v529, %v715
        %717 = vmatprep.mubr.bf16.mxu0 0
        %718 = vmatmul.mubr.bf16.gmra.mxu0 %v486
        %v719 = vpop.f32.mrf.mxu0
        %v720 = vadd.f32 %v525, %v719
        %v721 = vpop.f32.mrf.mxu0
        %v722 = vadd.f32 %v529, %v721
        %v723 = vpop.f32.mrf.mxu0
        %v724 = vadd.f32 %v525, %v723
        %v725 = vpop.f32.mrf.mxu0
        %v726 = vadd.f32 %v529, %v725
        %727 = vmatprep.mubr.bf16.mxu0 0
        %728 = vmatmul.mubr.bf16.gmra.mxu0 %v487
        %v729 = vpop.f32.mrf.mxu0
        %v730 = vadd.f32 %v525, %v729
        %v731 = vpop.f32.mrf.mxu0
        %v732 = vadd.f32 %v529, %v731
        %v733 = vpop.f32.mrf.mxu0
        %v734 = vadd.f32 %v525, %v733
        %v735 = vpop.f32.mrf.mxu0
        %v736 = vadd.f32 %v529, %v735
        %737 = vdwg.mxu0
        %738 = vmatprep.subr.bf16.mxu0 0
        %739 = vmatpush1.bf16.msra.mxu0 %v640
        %740 = vmatprep.subr.bf16.mxu0 0
        %741 = vmatpush1.bf16.msra.mxu0 %v637
        %742 = vmatprep.subr.bf16.mxu0 0
        %743 = vmatpush1.bf16.msra.mxu0 %v634
        %744 = vmatprep.subr.bf16.mxu0 0
        %745 = vmatpush1.bf16.msra.mxu0 %v631
        %746 = vmatprep.subr.bf16.mxu0 0
        %747 = vmatpush1.bf16.msra.mxu0 %v628
        %748 = vmatprep.subr.bf16.mxu0 0
        %749 = vmatpush1.bf16.msra.mxu0 %v625
        %750 = vmatprep.subr.bf16.mxu0 0
        %751 = vmatpush1.bf16.msra.mxu0 %v622
        %752 = vmatprep.subr.bf16.mxu0 0
        %753 = vmatpush1.bf16.msra.mxu0 %v619
        %754 = vmatprep.subr.bf16.mxu0 0
        %755 = vmatpush2.bf16.msra.mxu0 0
        %756 = vmatprep.subr.bf16.mxu0 0
        %757 = vmatpush2.bf16.msra.mxu0 0
        %758 = vmatprep.subr.bf16.mxu0 0
        %759 = vmatpush2.bf16.msra.mxu0 0
        %760 = vmatprep.subr.bf16.mxu0 0
        %761 = vmatpush2.bf16.msra.mxu0 0
        %762 = vmatprep.subr.bf16.mxu0 0
        %763 = vmatpush2.bf16.msra.mxu0 0
        %764 = vmatprep.subr.bf16.mxu0 0
        %765 = vmatpush2.bf16.msra.mxu0 0
        %766 = vmatprep.subr.bf16.mxu0 0
        %767 = vmatpush2.bf16.msra.mxu0 0
        %768 = vmatprep.subr.bf16.mxu0 0
        %769 = vmatpush2.bf16.msra.mxu0 0
        %770 = vmatprep.mubr.bf16.mxu0 0
        %771 = vmatmul.mubr.bf16.gmra.mxu0 %v484
        %v772 = vpop.f32.mrf.mxu0
        %v773 = vadd.f32 %v533, %v772
        %v774 = vpop.f32.mrf.mxu0
        %v775 = vpop.f32.mrf.mxu0
        %v776 = vadd.f32 %v533, %v775
        %v777 = vpop.f32.mrf.mxu0
        %778 = vmatprep.mubr.bf16.mxu0 0
        %779 = vmatmul.mubr.bf16.gmra.mxu0 %v485
        %v780 = vpop.f32.mrf.mxu0
        %v781 = vadd.f32 %v533, %v780
        %v782 = vpop.f32.mrf.mxu0
        %v783 = vpop.f32.mrf.mxu0
        %v784 = vadd.f32 %v533, %v783
        %v785 = vpop.f32.mrf.mxu0
        %786 = vmatprep.mubr.bf16.mxu0 0
        %787 = vmatmul.mubr.bf16.gmra.mxu0 %v486
        %v788 = vpop.f32.mrf.mxu0
        %v789 = vadd.f32 %v533, %v788
        %v790 = vpop.f32.mrf.mxu0
        %v791 = vpop.f32.mrf.mxu0
        %v792 = vadd.f32 %v533, %v791
        %v793 = vpop.f32.mrf.mxu0
        %794 = vmatprep.mubr.bf16.mxu0 0
        %795 = vmatmul.mubr.bf16.gmra.mxu0 %v487
        %v796 = vpop.f32.mrf.mxu0
        %v797 = vadd.f32 %v533, %v796
        %v798 = vpop.f32.mrf.mxu0
        %v799 = vpop.f32.mrf.mxu0
        %v800 = vadd.f32 %v533, %v799
        %v801 = vpop.f32.mrf.mxu0
        %802 = vdwg.mxu0
        %v803 = vpack.c.bf16 %v704, %v700
        %v804 = vpack.c.bf16 %v714, %v710
        %v805 = vpack.c.bf16 %v724, %v720
        %v806 = vpack.c.bf16 %v734, %v730
        %v811 = vunpack.c.l.b16 %v803
        %v812 = vunpack.c.h.b16 %v803
        %v813 = vunpack.c.l.b16 %v804
        %v814 = vunpack.c.h.b16 %v804
        %v815 = vunpack.c.l.b16 %v805
        %v816 = vunpack.c.h.b16 %v805
        %v817 = vunpack.c.l.b16 %v806
        %v818 = vunpack.c.h.b16 %v806
        %v819 = vpack.c.b16 %v811, %v811
        %v820 = vpack.c.b16 %v812, %v812
        %v821 = vpack.c.b16 %v813, %v813
        %v822 = vpack.c.b16 %v814, %v814
        %v823 = vpack.c.b16 %v815, %v815
        %v824 = vpack.c.b16 %v816, %v816
        %v825 = vpack.c.b16 %v817, %v817
        %v826 = vpack.c.b16 %v818, %v818
        %835 = vst [vmem:[%s337] sm:$0xf] %v819
        %836 = vst [vmem:[%s337 + $0x4] sm:$0xf] %v820
        %837 = vst [vmem:[%s337 + $0x8] sm:$0xf] %v821
        %838 = vst [vmem:[%s337 + $0xc] sm:$0xf] %v822
        %839 = vst [vmem:[%s337 + $0x10] sm:$0xf] %v823
        %840 = vst [vmem:[%s337 + $0x14] sm:$0xf] %v824
        %841 = vst [vmem:[%s337 + $0x18] sm:$0xf] %v825
        %842 = vst [vmem:[%s337 + $0x1c] sm:$0xf] %v826
        %v843 = vpack.c.bf16 %v706, %v702
        %v844 = vpack.c.bf16 %v716, %v712
        %v845 = vpack.c.bf16 %v726, %v722
        %v846 = vpack.c.bf16 %v736, %v732
        %v851 = vunpack.c.l.b16 %v843
        %v852 = vunpack.c.h.b16 %v843
        %v853 = vunpack.c.l.b16 %v844
        %v854 = vunpack.c.h.b16 %v844
        %v855 = vunpack.c.l.b16 %v845
        %v856 = vunpack.c.h.b16 %v845
        %v857 = vunpack.c.l.b16 %v846
        %v858 = vunpack.c.h.b16 %v846
        %v859 = vpack.c.b16 %v851, %v851
        %v860 = vpack.c.b16 %v852, %v852
        %v861 = vpack.c.b16 %v853, %v853
        %v862 = vpack.c.b16 %v854, %v854
        %v863 = vpack.c.b16 %v855, %v855
        %v864 = vpack.c.b16 %v856, %v856
        %v865 = vpack.c.b16 %v857, %v857
        %v866 = vpack.c.b16 %v858, %v858
        %875 = vst [vmem:[%s344] sm:$0xf] %v859
        %876 = vst [vmem:[%s344 + $0x4] sm:$0xf] %v860
        %877 = vst [vmem:[%s344 + $0x8] sm:$0xf] %v861
        %878 = vst [vmem:[%s344 + $0xc] sm:$0xf] %v862
        %879 = vst [vmem:[%s344 + $0x10] sm:$0xf] %v863
        %880 = vst [vmem:[%s344 + $0x14] sm:$0xf] %v864
        %881 = vst [vmem:[%s344 + $0x18] sm:$0xf] %v865
        %882 = vst [vmem:[%s344 + $0x1c] sm:$0xf] %v866
        %v883 = vpack.c.bf16 %v776, %v773
        %v884 = vpack.c.bf16 %v784, %v781
        %v885 = vpack.c.bf16 %v792, %v789
        %v886 = vpack.c.bf16 %v800, %v797
        %v891 = vunpack.c.l.b16 %v883
        %v892 = vunpack.c.h.b16 %v883
        %v893 = vunpack.c.l.b16 %v884
        %v894 = vunpack.c.h.b16 %v884
        %v895 = vunpack.c.l.b16 %v885
        %v896 = vunpack.c.h.b16 %v885
        %v897 = vunpack.c.l.b16 %v886
        %v898 = vunpack.c.h.b16 %v886
        %v899 = vpack.c.b16 %v891, %v891
        %v900 = vpack.c.b16 %v892, %v892
        %v901 = vpack.c.b16 %v893, %v893
        %v902 = vpack.c.b16 %v894, %v894
        %v903 = vpack.c.b16 %v895, %v895
        %v904 = vpack.c.b16 %v896, %v896
        %v905 = vpack.c.b16 %v897, %v897
        %v906 = vpack.c.b16 %v898, %v898
        %915 = vst [vmem:[%s351] sm:$0xf] %v899
        %916 = vst [vmem:[%s351 + $0x4] sm:$0xf] %v900
        %917 = vst [vmem:[%s351 + $0x8] sm:$0xf] %v901
        %918 = vst [vmem:[%s351 + $0xc] sm:$0xf] %v902
        %919 = vst [vmem:[%s351 + $0x10] sm:$0xf] %v903
        %920 = vst [vmem:[%s351 + $0x14] sm:$0xf] %v904
        %921 = vst [vmem:[%s351 + $0x18] sm:$0xf] %v905
        %922 = vst [vmem:[%s351 + $0x1c] sm:$0xf] %v906
        %s923 = sand.u32 %s163, 1
        %s924 = scalar_lea.sflag [#allocation4], %s923
        %s925 = sand.u32 %s163, 1
        %s926 = smul.addr %s925, 32
        %s927 = scalar_lea.vmem [#allocation7], %s926
        %s928 = sand.u32 %s29, 1
        %s929 = scalar_lea.sflag [#allocation9], %s928
        %s930 = sand.u32 %s191, 1
        %s931 = smul.addr %s930, 32
        %s932 = scalar_lea.vmem [#allocation8], %s931
        %s933 = sand.u32 %s29, 1
        %s934 = scalar_lea.sflag [#allocation9], %s933
        %s935 = sand.u32 %s219, 1
        %s936 = smul.addr %s935, 32
        %s937 = scalar_lea.vmem [#allocation10], %s936
        // Predicated region
        $region49: #{tpu_custom_call.1} parent=39 // pred_check
          %p938 = pneg %p173
        $region50: #{tpu_custom_call.1} parent=39 // pred_check_branch
          %940 = sbr.rel (%p938) target = $region52
        $region51: #{tpu_custom_call.1} parent=39 // pred_region
          %s941 = smul.u32 8, %s34
          %s943 = ssub.s32 512, 512
          %944 = vsyncadd %s924, %s943
          %s945 = smul.addr %s33, 16
          %s946 = sadd.s32 %s941, %s945
          %s947 = smul.addr %s946, 64
          %s948 = scalar_lea.hbm %s5, %s947
          %s949 = sshll.u32 %s927, 4
          %s950 = int_to_ptr.vmem [resolvable:$true] %s949
          %955 = dma.vmem_to_hbm [thread:$0]  %s950, 512, %s948, %s924, 64, 64, 4
        $region52: #{tpu_custom_call.1} parent=39 // pred_fallthru
          _
        // Predicated region
        $region53: #{tpu_custom_call.1} parent=39 // pred_check
          %p956 = pneg %p201
        $region54: #{tpu_custom_call.1} parent=39 // pred_check_branch
          %958 = sbr.rel (%p956) target = $region56
        $region55: #{tpu_custom_call.1} parent=39 // pred_region
          %s959 = smul.u32 8, %s34
          %s961 = ssub.s32 512, 512
          %962 = vsyncadd %s929, %s961
          %s963 = smul.addr %s33, 16
          %s964 = sadd.s32 %s959, %s963
          %s965 = smul.addr %s964, 64
          %s966 = scalar_lea.hbm %s6, %s965
          %s967 = sshll.u32 %s932, 4
          %s968 = int_to_ptr.vmem [resolvable:$true] %s967
          %973 = dma.vmem_to_hbm [thread:$0]  %s968, 512, %s966, %s929, 64, 64, 4
        $region56: #{tpu_custom_call.1} parent=39 // pred_fallthru
          _
        // Predicated region
        $region57: #{tpu_custom_call.1} parent=39 // pred_check
          %p974 = pneg %p229
        $region58: #{tpu_custom_call.1} parent=39 // pred_check_branch
          %976 = sbr.rel (%p974) target = $region60
        $region59: #{tpu_custom_call.1} parent=39 // pred_region
          %s977 = smul.u32 8, %s34
          %s979 = ssub.s32 512, 512
          %980 = vsyncadd %s934, %s979
          %s981 = smul.addr %s33, 16
          %s982 = sadd.s32 %s977, %s981
          %s983 = smul.addr %s982, 64
          %s984 = scalar_lea.hbm %s7, %s983
          %s985 = sshll.u32 %s937, 4
          %s986 = int_to_ptr.vmem [resolvable:$true] %s985
          %991 = dma.vmem_to_hbm [thread:$0]  %s986, 512, %s984, %s934, 64, 64, 4
        $region60: #{tpu_custom_call.1} parent=39 // pred_fallthru
          _
      $region40: #{tpu_custom_call.1} parent=5 // pred_fallthru
        _
      %p992 = scmp.le.s32.totalorder 2, %s24
      // Predicated region
      $region61: #{tpu_custom_call.1} parent=5 // pred_check
        %p993 = pneg %p992
      $region62: #{tpu_custom_call.1} parent=5 // pred_check_branch
        %995 = sbr.rel (%p993) target = $region64
      $region63: #{tpu_custom_call.1} parent=5 // pred_region
        %s996 = ssub.s32 %s24, 2
        // Predicated region
        $region65: #{tpu_custom_call.1} parent=63 // pred_check
          %p997 = pneg %p179
        $region66: #{tpu_custom_call.1} parent=63 // pred_check_branch
          %999 = sbr.rel (%p997) target = $region68
        $region67: #{tpu_custom_call.1} parent=63 // pred_region
          %s1000 = sand.u32 %s164, 1
          %s1001 = scalar_lea.sflag [#allocation4], %s1000
          %s1002 = sand.u32 %s164, 1
          %s1003 = smul.addr %s1002, 32
          %s1004 = scalar_lea.vmem [#allocation7], %s1003
          %1005 = dma.done %s1001, 512
        $region68: #{tpu_custom_call.1} parent=63 // pred_fallthru
          _
        // Predicated region
        $region69: #{tpu_custom_call.1} parent=63 // pred_check
          %p1006 = pneg %p207
        $region70: #{tpu_custom_call.1} parent=63 // pred_check_branch
          %1008 = sbr.rel (%p1006) target = $region72
        $region71: #{tpu_custom_call.1} parent=63 // pred_region
          %s1009 = sand.u32 %s30, 1
          %s1010 = scalar_lea.sflag [#allocation9], %s1009
          %s1011 = sand.u32 %s192, 1
          %s1012 = smul.addr %s1011, 32
          %s1013 = scalar_lea.vmem [#allocation8], %s1012
          %1014 = dma.done %s1010, 512
        $region72: #{tpu_custom_call.1} parent=63 // pred_fallthru
          _
        // Predicated region
        $region73: #{tpu_custom_call.1} parent=63 // pred_check
          %p1015 = pneg %p235
        $region74: #{tpu_custom_call.1} parent=63 // pred_check_branch
          %1017 = sbr.rel (%p1015) target = $region76
        $region75: #{tpu_custom_call.1} parent=63 // pred_region
          %s1018 = sand.u32 %s30, 1
          %s1019 = scalar_lea.sflag [#allocation9], %s1018
          %s1020 = sand.u32 %s220, 1
          %s1021 = smul.addr %s1020, 32
          %s1022 = scalar_lea.vmem [#allocation10], %s1021
          %1023 = dma.done %s1019, 512
        $region76: #{tpu_custom_call.1} parent=63 // pred_fallthru
          _
      $region64: #{tpu_custom_call.1} parent=5 // pred_fallthru
        _
    $region6: #{tpu_custom_call.1} parent=1 // loop_footer
      %s28 = sadd.s32 1, %s24
    $region7: #{tpu_custom_call.1} parent=1 // loop_footer_branch
      %23 = sbr.rel target = $region3
    $region8: #{tpu_custom_call.1} parent=1 // loop_exit
      _
    %1024 = vsyncpa [#allocation3], 1
    %s1025 = scalar_lea.sflag [#allocation3], 1
    %1026 = vsyncpa %s1025, 1
    %1027 = vsyncpa [#allocation6], 1
    %1028 = vsyncpa [#allocation4], 1
    %s1029 = scalar_lea.sflag [#allocation4], 1
    %1030 = vsyncpa %s1029, 1
    %1031 = vsyncpa [#allocation9], 1
    %s1032 = scalar_lea.sflag [#allocation9], 1
    %1033 = vsyncpa %s1032, 1

// kernel: tpu_custom_call.1
$region0: #{tpu_custom_call.1}
  #allocation0 [shape = 'u32[]', space=smem, size = 0x4, offset = 0x4, fixed_abs, tag = 'smem constant byte address 0x4 - core index']
  #allocation1 [shape = 'u32[144,128]{1,0:T(1,128)}', space=vmem, size = 0x12000, scoped, tag = 'internal scratch']
  %s0 = inlined_call_operand.hbm [shape: f32[2,128,128], index: 0, kind: input, shape index: {}]
  %s1 = inlined_call_operand.vmem [shape: f32[1,128], index: 1, kind: input, shape index: {}]
  %s2 = inlined_call_operand.vmem [shape: f32[1,128], index: 2, kind: input, shape index: {}]
  %s3 = inlined_call_operand.hbm [shape: bf16[128,384], index: 3, kind: input, shape index: {}]
  %s4 = inlined_call_operand.vmem [shape: f32[1,384], index: 4, kind: input, shape index: {}]
  %s5 = inlined_call_operand.hbm [shape: bf16[2,128,128], index: 5, kind: output, shape index: {0}]
  %s6 = inlined_call_operand.hbm [shape: bf16[2,128,128], index: 6, kind: output, shape index: {1}]
  %s7 = inlined_call_operand.hbm [shape: bf16[2,128,128], index: 7, kind: output, shape index: {2}]
  %8 = xla_tuple %s5, %s6, %s7
  %s9 = sld [smem:[#allocation0]]
  $region77: #{tpu_custom_call.1} parent=0
    _
  %s11 = ssub.s32 1, %s9
  %s12 = scalar_select 0, %s11, %s9
  $region1: #{tpu_custom_call.1} parent=0
    #allocation2 [shape = 'u8[65536]{0}', space=vmem, size = 0x10000, scoped, tag = 'input window, operand 0']
    #allocation3 [shape = 's32[2]{0}', space=sflag, size = 0x8, scoped, tag = 'scoped memory for tpu_custom_call.1']
    #allocation4 [shape = 's32[2]{0}', space=sflag, size = 0x8, scoped, tag = 'scoped memory for tpu_custom_call.1']
    #allocation5 [shape = 'u8[98304]{0}', space=vmem, size = 0x18000, scoped, tag = 'input window, operand 3, single buffered']
    #allocation6 [shape = 's32[1]{0}', space=sflag, size = 0x4, scoped, tag = 'scoped memory for tpu_custom_call.1']
    #allocation7 [shape = 'u8[32768]{0}', space=vmem, size = 0x8000, scoped, tag = 'output window, operand 0']
    #allocation8 [shape = 'u8[32768]{0}', space=vmem, size = 0x8000, scoped, tag = 'output window, operand 1']
    #allocation9 [shape = 's32[2]{0}', space=sflag, size = 0x8, scoped, tag = 'scoped memory for tpu_custom_call.1']
    #allocation10 [shape = 'u8[32768]{0}', space=vmem, size = 0x8000, scoped, tag = 'output window, operand 2']
    %13 = vsyncpa [#allocation3], 0
    %s14 = scalar_lea.sflag [#allocation3], 1
    %15 = vsyncpa %s14, 0
    %16 = vsyncpa [#allocation6], 0
    %17 = vsyncpa [#allocation4], 0
    %s18 = scalar_lea.sflag [#allocation4], 1
    %19 = vsyncpa %s18, 0
    %20 = vsyncpa [#allocation9], 0
    %s21 = scalar_lea.sflag [#allocation9], 1
    %22 = vsyncpa %s21, 0
    loop: start=0, step=1, limit=6
    $region2: #{tpu_custom_call.1} parent=1 // loop_pre_header
      _
    $region3: #{tpu_custom_call.1} parent=1 // loop_header
      %s24 = sphi 0, %s28
      %p25 = scmp.ge.s32.totalorder %s24, 6
      %s31 = sphi 0, %s43
      %s32 = sphi 0, %s39
      %s33 = sphi 0, %s31
      %s34 = sphi 0, %s32
      %s35 = sphi 0, %s33
      %s36 = sphi 0, %s34
      %s48 = sphi 0, %s50
      %s51 = sphi 0, %s48
      %s52 = sphi 0, %s51
      %s68 = sphi 0, %s52
      %s72 = sphi 0, %s72
      %s74 = sphi 0, %s72
      %s75 = sphi 0, %s74
      %s89 = sphi 0, %s75
      %s93 = sphi 0, %s93
      %s95 = sphi 0, %s93
      %s96 = sphi 0, %s95
      %s110 = sphi 0, %s96
      %s114 = sphi 0, %s114
      %s116 = sphi 0, %s114
      %s117 = sphi 0, %s116
      %s131 = sphi 0, %s117
      %s135 = sphi 0, %s135
      %s137 = sphi 0, %s135
      %s138 = sphi 0, %s137
      %s152 = sphi 0, %s138
      %s160 = sphi 0, %s162
      %s163 = sphi 0, %s160
      %s164 = sphi 0, %s163
      %s180 = sphi 0, %s164
      %s188 = sphi 0, %s190
      %s191 = sphi 0, %s188
      %s192 = sphi 0, %s191
      %s208 = sphi 0, %s192
      %s216 = sphi 0, %s218
      %s219 = sphi 0, %s216
      %s220 = sphi 0, %s219
      %s236 = sphi 0, %s220
    $region4: #{tpu_custom_call.1} parent=1 // loop_header_branch
      %27 = sbr.rel (%p25) target = $region8
    $region5: #{tpu_custom_call.1} parent=1 // loop_body
      %s29 = ssub.s32 %s24, 1
      %s30 = ssub.s32 %s24, 2
      %s37 = sadd.s32 1, %s32
      %p38 = scmp.ge.s32.totalorder %s37, 2
      %s39 = scalar_select %p38, 0, %s37
      %s40 = sadd.s32 1, %s31
      %s41 = scalar_select %p38, %s40, %s31
      %p42 = scmp.ge.s32.totalorder %s41, 2
      %s43 = scalar_select %p42, 0, %s41
      %s44 = ssub.s32 %s31, %s43
      %s45 = ssub.s32 %s32, %s39
      %s46 = sor.u32 %s44, %s45
      %p47 = scmp.eq.s32.totalorder %s46, 0
      %s49 = sadd.s32 %s48, 1
      %s50 = scalar_select %p47, %s48, %s49
      %p53 = pneg %p47
      %p54 = scmp.eq.s32.totalorder %s24, 3
      %p55 = por %p53, %p54
      %p56 = scmp.ne.s32.totalorder %s48, %s51
      %p57 = scmp.eq.s32.totalorder %s24, 0
      %p58 = por %p56, %p57
      %p59 = scmp.ne.s32.totalorder %s48, %s51
      %p60 = scmp.eq.s32.totalorder %s29, 3
      %p61 = por %p59, %p60
      %p62 = scmp.ne.s32.totalorder %s51, %s52
      %p63 = scmp.eq.s32.totalorder %s29, 0
      %p64 = por %p62, %p63
      %p65 = scmp.ne.s32.totalorder %s51, %s52
      %p66 = scmp.eq.s32.totalorder %s30, 3
      %p67 = por %p65, %p66
      %p69 = scmp.ne.s32.totalorder %s52, %s68
      %p70 = scmp.eq.s32.totalorder %s30, 0
      %p71 = por %p69, %p70
      %s73 = sadd.s32 %s72, 1
      %p76 = scmp.eq.s32.totalorder %s24, 3
      %p77 = scmp.ne.s32.totalorder %s72, %s74
      %p78 = scmp.eq.s32.totalorder %s24, 0
      %p79 = por %p77, %p78
      %p80 = scmp.ne.s32.totalorder %s72, %s74
      %p81 = scmp.eq.s32.totalorder %s29, 3
      %p82 = por %p80, %p81
      %p83 = scmp.ne.s32.totalorder %s74, %s75
      %p84 = scmp.eq.s32.totalorder %s29, 0
      %p85 = por %p83, %p84
      %p86 = scmp.ne.s32.totalorder %s74, %s75
      %p87 = scmp.eq.s32.totalorder %s30, 3
      %p88 = por %p86, %p87
      %p90 = scmp.ne.s32.totalorder %s75, %s89
      %p91 = scmp.eq.s32.totalorder %s30, 0
      %p92 = por %p90, %p91
      %s94 = sadd.s32 %s93, 1
      %p97 = scmp.eq.s32.totalorder %s24, 3
      %p98 = scmp.ne.s32.totalorder %s93, %s95
      %p99 = scmp.eq.s32.totalorder %s24, 0
      %p100 = por %p98, %p99
      %p101 = scmp.ne.s32.totalorder %s93, %s95
      %p102 = scmp.eq.s32.totalorder %s29, 3
      %p103 = por %p101, %p102
      %p104 = scmp.ne.s32.totalorder %s95, %s96
      %p105 = scmp.eq.s32.totalorder %s29, 0
      %p106 = por %p104, %p105
      %p107 = scmp.ne.s32.totalorder %s95, %s96
      %p108 = scmp.eq.s32.totalorder %s30, 3
      %p109 = por %p107, %p108
      %p111 = scmp.ne.s32.totalorder %s96, %s110
      %p112 = scmp.eq.s32.totalorder %s30, 0
      %p113 = por %p111, %p112
      %s115 = sadd.s32 %s114, 1
      %p118 = scmp.eq.s32.totalorder %s24, 3
      %p119 = scmp.ne.s32.totalorder %s114, %s116
      %p120 = scmp.eq.s32.totalorder %s24, 0
      %p121 = por %p119, %p120
      %p122 = scmp.ne.s32.totalorder %s114, %s116
      %p123 = scmp.eq.s32.totalorder %s29, 3
      %p124 = por %p122, %p123
      %p125 = scmp.ne.s32.totalorder %s116, %s117
      %p126 = scmp.eq.s32.totalorder %s29, 0
      %p127 = por %p125, %p126
      %p128 = scmp.ne.s32.totalorder %s116, %s117
      %p129 = scmp.eq.s32.totalorder %s30, 3
      %p130 = por %p128, %p129
      %p132 = scmp.ne.s32.totalorder %s117, %s131
      %p133 = scmp.eq.s32.totalorder %s30, 0
      %p134 = por %p132, %p133
      %s136 = sadd.s32 %s135, 1
      %p139 = scmp.eq.s32.totalorder %s24, 3
      %p140 = scmp.ne.s32.totalorder %s135, %s137
      %p141 = scmp.eq.s32.totalorder %s24, 0
      %p142 = por %p140, %p141
      %p143 = scmp.ne.s32.totalorder %s135, %s137
      %p144 = scmp.eq.s32.totalorder %s29, 3
      %p145 = por %p143, %p144
      %p146 = scmp.ne.s32.totalorder %s137, %s138
      %p147 = scmp.eq.s32.totalorder %s29, 0
      %p148 = por %p146, %p147
      %p149 = scmp.ne.s32.totalorder %s137, %s138
      %p150 = scmp.eq.s32.totalorder %s30, 3
      %p151 = por %p149, %p150
      %p153 = scmp.ne.s32.totalorder %s138, %s152
      %p154 = scmp.eq.s32.totalorder %s30, 0
      %p155 = por %p153, %p154
      %s156 = ssub.s32 %s31, %s43
      %s157 = ssub.s32 %s32, %s39
      %s158 = sor.u32 %s156, %s157
      %p159 = scmp.eq.s32.totalorder %s158, 0
      %s161 = sadd.s32 %s160, 1
      %s162 = scalar_select %p159, %s160, %s161
      %p165 = pneg %p159
      %p166 = scmp.eq.s32.totalorder %s24, 3
      %p167 = por %p165, %p166
      %p168 = scmp.ne.s32.totalorder %s160, %s163
      %p169 = scmp.eq.s32.totalorder %s24, 0
      %p170 = por %p168, %p169
      %p171 = scmp.ne.s32.totalorder %s160, %s163
      %p172 = scmp.eq.s32.totalorder %s29, 3
      %p173 = por %p171, %p172
      %p174 = scmp.ne.s32.totalorder %s163, %s164
      %p175 = scmp.eq.s32.totalorder %s29, 0
      %p176 = por %p174, %p175
      %p177 = scmp.ne.s32.totalorder %s163, %s164
      %p178 = scmp.eq.s32.totalorder %s30, 3
      %p179 = por %p177, %p178
      %p181 = scmp.ne.s32.totalorder %s164, %s180
      %p182 = scmp.eq.s32.totalorder %s30, 0
      %p183 = por %p181, %p182
      %s184 = ssub.s32 %s31, %s43
      %s185 = ssub.s32 %s32, %s39
      %s186 = sor.u32 %s184, %s185
      %p187 = scmp.eq.s32.totalorder %s186, 0
      %s189 = sadd.s32 %s188, 1
      %s190 = scalar_select %p187, %s188, %s189
      %p193 = pneg %p187
      %p194 = scmp.eq.s32.totalorder %s24, 3
      %p195 = por %p193, %p194
      %p196 = scmp.ne.s32.totalorder %s188, %s191
      %p197 = scmp.eq.s32.totalorder %s24, 0
      %p198 = por %p196, %p197
      %p199 = scmp.ne.s32.totalorder %s188, %s191
      %p200 = scmp.eq.s32.totalorder %s29, 3
      %p201 = por %p199, %p200
      %p202 = scmp.ne.s32.totalorder %s191, %s192
      %p203 = scmp.eq.s32.totalorder %s29, 0
      %p204 = por %p202, %p203
      %p205 = scmp.ne.s32.totalorder %s191, %s192
      %p206 = scmp.eq.s32.totalorder %s30, 3
      %p207 = por %p205, %p206
      %p209 = scmp.ne.s32.totalorder %s192, %s208
      %p210 = scmp.eq.s32.totalorder %s30, 0
      %p211 = por %p209, %p210
      %s212 = ssub.s32 %s31, %s43
      %s213 = ssub.s32 %s32, %s39
      %s214 = sor.u32 %s212, %s213
      %p215 = scmp.eq.s32.totalorder %s214, 0
      %s217 = sadd.s32 %s216, 1
      %s218 = scalar_select %p215, %s216, %s217
      %p221 = pneg %p215
      %p222 = scmp.eq.s32.totalorder %s24, 3
      %p223 = por %p221, %p222
      %p224 = scmp.ne.s32.totalorder %s216, %s219
      %p225 = scmp.eq.s32.totalorder %s24, 0
      %p226 = por %p224, %p225
      %p227 = scmp.ne.s32.totalorder %s216, %s219
      %p228 = scmp.eq.s32.totalorder %s29, 3
      %p229 = por %p227, %p228
      %p230 = scmp.ne.s32.totalorder %s219, %s220
      %p231 = scmp.eq.s32.totalorder %s29, 0
      %p232 = por %p230, %p231
      %p233 = scmp.ne.s32.totalorder %s219, %s220
      %p234 = scmp.eq.s32.totalorder %s30, 3
      %p235 = por %p233, %p234
      %p237 = scmp.ne.s32.totalorder %s220, %s236
      %p238 = scmp.eq.s32.totalorder %s30, 0
      %p239 = por %p237, %p238
      %p240 = scmp.le.s32.totalorder 1, %s24
      %p241 = scmp.lt.s32.totalorder %s24, 5
      %p242 = pnand %p240, %p241
      %p243 = pneg %p242
      // Predicated region
      $region9: #{tpu_custom_call.1} parent=5 // pred_check
        _
      $region10: #{tpu_custom_call.1} parent=5 // pred_check_branch
        %245 = sbr.rel (%p242) target = $region12
      $region11: #{tpu_custom_call.1} parent=5 // pred_region
        %s246 = ssub.s32 %s24, 1
        // Predicated region
        $region13: #{tpu_custom_call.1} parent=11 // pred_check
          %p247 = pneg %p85
        $region14: #{tpu_custom_call.1} parent=11 // pred_check_branch
          %249 = sbr.rel (%p247) target = $region16
        $region15: #{tpu_custom_call.1} parent=11 // pred_region
          _
        $region16: #{tpu_custom_call.1} parent=11 // pred_fallthru
          _
        // Predicated region
        $region17: #{tpu_custom_call.1} parent=11 // pred_check
          %p250 = pneg %p106
        $region18: #{tpu_custom_call.1} parent=11 // pred_check_branch
          %252 = sbr.rel (%p250) target = $region20
        $region19: #{tpu_custom_call.1} parent=11 // pred_region
          _
        $region20: #{tpu_custom_call.1} parent=11 // pred_fallthru
          _
        // Predicated region
        $region21: #{tpu_custom_call.1} parent=11 // pred_check
          %p253 = pneg %p127
        $region22: #{tpu_custom_call.1} parent=11 // pred_check_branch
          %255 = sbr.rel (%p253) target = $region24
        $region23: #{tpu_custom_call.1} parent=11 // pred_region
          %s257 = ssub.s32 3072, 3072
          %258 = vsyncadd [#allocation6], %s257
          %s259 = sshll.u32 [#allocation5], 4
          %s260 = int_to_ptr.vmem [resolvable:$true] %s259
          %265 = dma.hbm_to_vmem [thread:$0]  %s3, 3072, %s260, [#allocation6], 192, 192, 12
        $region24: #{tpu_custom_call.1} parent=11 // pred_fallthru
          _
        // Predicated region
        $region25: #{tpu_custom_call.1} parent=11 // pred_check
          %p266 = pneg %p148
        $region26: #{tpu_custom_call.1} parent=11 // pred_check_branch
          %268 = sbr.rel (%p266) target = $region28
        $region27: #{tpu_custom_call.1} parent=11 // pred_region
          _
        $region28: #{tpu_custom_call.1} parent=11 // pred_fallthru
          _
      $region12: #{tpu_custom_call.1} parent=5 // pred_fallthru
        _
      %p269 = scmp.lt.s32.totalorder %s24, 4
      // Predicated region
      $region29: #{tpu_custom_call.1} parent=5 // pred_check
        %p270 = pneg %p269
      $region30: #{tpu_custom_call.1} parent=5 // pred_check_branch
        %272 = sbr.rel (%p270) target = $region32
      $region31: #{tpu_custom_call.1} parent=5 // pred_region
        // Predicated region
        $region33: #{tpu_custom_call.1} parent=31 // pred_check
          %p273 = pneg %p58
        $region34: #{tpu_custom_call.1} parent=31 // pred_check_branch
          %275 = sbr.rel (%p273) target = $region36
        $region35: #{tpu_custom_call.1} parent=31 // pred_region
          %s276 = sand.u32 %s48, 1
          %s277 = scalar_lea.sflag [#allocation3], %s276
          %s278 = sand.u32 %s48, 1
          %s279 = smul.addr %s278, 64
          %s280 = scalar_lea.vmem [#allocation2], %s279
          %s281 = smul.u32 8, %s32
          %s283 = ssub.s32 1024, 1024
          %284 = vsyncadd %s277, %s283
          %s285 = smul.addr %s31, 16
          %s286 = sadd.s32 %s281, %s285
          %s287 = smul.addr %s286, 128
          %s288 = scalar_lea.hbm %s0, %s287
          %s289 = sshll.u32 %s280, 4
          %s290 = int_to_ptr.vmem [resolvable:$true] %s289
          %295 = dma.hbm_to_vmem [thread:$0]  %s288, 1024, %s290, %s277, 128, 128, 8
        $region36: #{tpu_custom_call.1} parent=31 // pred_fallthru
          _
      $region32: #{tpu_custom_call.1} parent=5 // pred_fallthru
        _
      %p296 = scmp.le.s32.totalorder 1, %s24
      %p297 = scmp.lt.s32.totalorder %s24, 5
      %p298 = pnand %p296, %p297
      %p299 = pneg %p298
      // Predicated region
      $region37: #{tpu_custom_call.1} parent=5 // pred_check
        _
      $region38: #{tpu_custom_call.1} parent=5 // pred_check_branch
        %301 = sbr.rel (%p298) target = $region40
      $region39: #{tpu_custom_call.1} parent=5 // pred_region
        %s302 = ssub.s32 %s24, 1
        %s303 = sand.u32 %s51, 1
        %s304 = scalar_lea.sflag [#allocation3], %s303
        %s305 = sand.u32 %s51, 1
        %s306 = smul.addr %s305, 64
        %s307 = scalar_lea.vmem [#allocation2], %s306
        // Predicated region
        $region41: #{tpu_custom_call.1} parent=39 // pred_check
          %p308 = pneg %p64
        $region42: #{tpu_custom_call.1} parent=39 // pred_check_branch
          %310 = sbr.rel (%p308) target = $region44
        $region43: #{tpu_custom_call.1} parent=39 // pred_region
          %311 = dma.done %s304, 1024
        $region44: #{tpu_custom_call.1} parent=39 // pred_fallthru
          _
        // Predicated region
        $region45: #{tpu_custom_call.1} parent=39 // pred_check
          %p312 = pneg %p127
        $region46: #{tpu_custom_call.1} parent=39 // pred_check_branch
          %314 = sbr.rel (%p312) target = $region48
        $region47: #{tpu_custom_call.1} parent=39 // pred_region
          %315 = dma.done [#allocation6], 3072
        $region48: #{tpu_custom_call.1} parent=39 // pred_fallthru
          _
        %s316 = sand.u32 %s51, 1
        %s317 = scalar_lea.sflag [#allocation3], %s316
        %s318 = sand.u32 %s51, 1
        %s319 = smul.addr %s318, 64
        %s320 = scalar_lea.vmem [#allocation2], %s319
        %p321 = pneg %p64
        %p322 = pneg %p61
        %p323 = pneg %p85
        %p324 = pneg %p82
        %p325 = pneg %p106
        %p326 = pneg %p103
        %p327 = pneg %p127
        %p328 = pneg %p124
        %p329 = pneg %p148
        %p330 = pneg %p145
        %p331 = pneg %p176
        %p332 = pneg %p173
        %s333 = sand.u32 %s163, 1
        %s334 = scalar_lea.sflag [#allocation4], %s333
        %s335 = sand.u32 %s163, 1
        %s336 = smul.addr %s335, 32
        %s337 = scalar_lea.vmem [#allocation7], %s336
        %p338 = pneg %p204
        %p339 = pneg %p201
        %s340 = sand.u32 %s29, 1
        %s341 = scalar_lea.sflag [#allocation9], %s340
        %s342 = sand.u32 %s191, 1
        %s343 = smul.addr %s342, 32
        %s344 = scalar_lea.vmem [#allocation8], %s343
        %p345 = pneg %p232
        %p346 = pneg %p229
        %s347 = sand.u32 %s29, 1
        %s348 = scalar_lea.sflag [#allocation9], %s347
        %s349 = sand.u32 %s219, 1
        %s350 = smul.addr %s349, 32
        %s351 = scalar_lea.vmem [#allocation10], %s350
        %s352 = smul.u32 8, %s34
        %s353 = smul.u32 8, %s34
        %s354 = smul.u32 8, %s34
        %s355 = smul.u32 8, %s34
        %v357 = vld [vmem:[%s307] sm:$0xff]
        %v358 = vld [vmem:[%s307 + $0x8] sm:$0xff]
        %v359 = vld [vmem:[%s307 + $0x10] sm:$0xff]
        %v360 = vld [vmem:[%s307 + $0x18] sm:$0xff]
        %v361 = vld [vmem:[%s307 + $0x20] sm:$0xff]
        %v362 = vld [vmem:[%s307 + $0x28] sm:$0xff]
        %v363 = vld [vmem:[%s307 + $0x30] sm:$0xff]
        %v364 = vld [vmem:[%s307 + $0x38] sm:$0xff]
        %v365 = vld [vmem:[%s1] sm:$0x1]
        %v366 = vld [vmem:[%s2] sm:$0x1]
        %367 = vadd.xlane.f32.xlu0 %v357
        %v368 = vpop.xlane.xlu0 %367
        %369 = vadd.xlane.f32.xlu0 %v358
        %v370 = vpop.xlane.xlu0 %369
        %371 = vadd.xlane.f32.xlu0 %v359
        %v372 = vpop.xlane.xlu0 %371
        %373 = vadd.xlane.f32.xlu0 %v360
        %v374 = vpop.xlane.xlu0 %373
        %375 = vadd.xlane.f32.xlu0 %v361
        %v376 = vpop.xlane.xlu0 %375
        %377 = vadd.xlane.f32.xlu0 %v362
        %v378 = vpop.xlane.xlu0 %377
        %379 = vadd.xlane.f32.xlu0 %v363
        %v380 = vpop.xlane.xlu0 %379
        %381 = vadd.xlane.f32.xlu0 %v364
        %v382 = vpop.xlane.xlu0 %381
        %v383 = vrcp.pop 128.0
        %v384 = vmul.f32 %v368, %v383
        %v385 = vmul.f32 %v370, %v383
        %v386 = vmul.f32 %v372, %v383
        %v387 = vmul.f32 %v374, %v383
        %v388 = vmul.f32 %v376, %v383
        %v389 = vmul.f32 %v378, %v383
        %v390 = vmul.f32 %v380, %v383
        %v391 = vmul.f32 %v382, %v383
        %v392 = vsub.f32 %v357, %v384
        %v393 = vsub.f32 %v358, %v385
        %v394 = vsub.f32 %v359, %v386
        %v395 = vsub.f32 %v360, %v387
        %v396 = vsub.f32 %v361, %v388
        %v397 = vsub.f32 %v362, %v389
        %v398 = vsub.f32 %v363, %v390
        %v399 = vsub.f32 %v364, %v391
        %v400 = vmul.f32 %v392, %v392
        %v401 = vmul.f32 %v393, %v393
        %v402 = vmul.f32 %v394, %v394
        %v403 = vmul.f32 %v395, %v395
        %v404 = vmul.f32 %v396, %v396
        %v405 = vmul.f32 %v397, %v397
        %v406 = vmul.f32 %v398, %v398
        %v407 = vmul.f32 %v399, %v399
        %408 = vadd.xlane.f32.xlu0 %v400
        %v409 = vpop.xlane.xlu0 %408
        %410 = vadd.xlane.f32.xlu0 %v401
        %v411 = vpop.xlane.xlu0 %410
        %412 = vadd.xlane.f32.xlu0 %v402
        %v413 = vpop.xlane.xlu0 %412
        %414 = vadd.xlane.f32.xlu0 %v403
        %v415 = vpop.xlane.xlu0 %414
        %416 = vadd.xlane.f32.xlu0 %v404
        %v417 = vpop.xlane.xlu0 %416
        %418 = vadd.xlane.f32.xlu0 %v405
        %v419 = vpop.xlane.xlu0 %418
        %420 = vadd.xlane.f32.xlu0 %v406
        %v421 = vpop.xlane.xlu0 %420
        %422 = vadd.xlane.f32.xlu0 %v407
        %v423 = vpop.xlane.xlu0 %422
        %v424 = vmul.f32 %v409, %v383
        %v425 = vmul.f32 %v411, %v383
        %v426 = vmul.f32 %v413, %v383
        %v427 = vmul.f32 %v415, %v383
        %v428 = vmul.f32 %v417, %v383
        %v429 = vmul.f32 %v419, %v383
        %v430 = vmul.f32 %v421, %v383
        %v431 = vmul.f32 %v423, %v383
        %v432 = vadd.f32 %v424, 1e-05
        %v433 = vadd.f32 %v425, 1e-05
        %v434 = vadd.f32 %v426, 1e-05
        %v435 = vadd.f32 %v427, 1e-05
        %v436 = vadd.f32 %v428, 1e-05
        %v437 = vadd.f32 %v429, 1e-05
        %v438 = vadd.f32 %v430, 1e-05
        %v439 = vadd.f32 %v431, 1e-05
        %v440 = vrsqrt.pop %v432
        %v441 = vrsqrt.pop %v433
        %v442 = vrsqrt.pop %v434
        %v443 = vrsqrt.pop %v435
        %v444 = vrsqrt.pop %v436
        %v445 = vrsqrt.pop %v437
        %v446 = vrsqrt.pop %v438
        %v447 = vrsqrt.pop %v439
        %v448 = vmul.f32 %v392, %v440
        %v449 = vmul.f32 %v393, %v441
        %v450 = vmul.f32 %v394, %v442
        %v451 = vmul.f32 %v395, %v443
        %v452 = vmul.f32 %v396, %v444
        %v453 = vmul.f32 %v397, %v445
        %v454 = vmul.f32 %v398, %v446
        %v455 = vmul.f32 %v399, %v447
        %v457 = vlaneseq
        %v458 = vshrl.u32 %v457, 7
        %v459 = vsub.s32 0, %v458
        %v460 = vrot.slane %v365, %v459
        %v462 = vmul.f32 %v448, %v460
        %v463 = vmul.f32 %v449, %v460
        %v464 = vmul.f32 %v450, %v460
        %v465 = vmul.f32 %v451, %v460
        %v466 = vmul.f32 %v452, %v460
        %v467 = vmul.f32 %v453, %v460
        %v468 = vmul.f32 %v454, %v460
        %v469 = vmul.f32 %v455, %v460
        %v471 = vlaneseq
        %v472 = vshrl.u32 %v471, 7
        %v473 = vsub.s32 0, %v472
        %v474 = vrot.slane %v366, %v473
        %v476 = vadd.f32 %v462, %v474
        %v477 = vadd.f32 %v463, %v474
        %v478 = vadd.f32 %v464, %v474
        %v479 = vadd.f32 %v465, %v474
        %v480 = vadd.f32 %v466, %v474
        %v481 = vadd.f32 %v467, %v474
        %v482 = vadd.f32 %v468, %v474
        %v483 = vadd.f32 %v469, %v474
        %v484 = vpack.c.bf16 %v477, %v476
        %v485 = vpack.c.bf16 %v479, %v478
        %v486 = vpack.c.bf16 %v481, %v480
        %v487 = vpack.c.bf16 %v483, %v482
        %v488 = vld [vmem:[#allocation5] sm:$0xff]
        %v489 = vld [vmem:[#allocation5 + $0x8] sm:$0xf]
        %v490 = vld [vmem:[#allocation5 + $0xc] sm:$0xff]
        %v491 = vld [vmem:[#allocation5 + $0x14] sm:$0xf]
        %v492 = vld [vmem:[#allocation5 + $0x18] sm:$0xff]
        %v493 = vld [vmem:[#allocation5 + $0x20] sm:$0xf]
        %v494 = vld [vmem:[#allocation5 + $0x24] sm:$0xff]
        %v495 = vld [vmem:[#allocation5 + $0x2c] sm:$0xf]
        %v496 = vld [vmem:[#allocation5 + $0x30] sm:$0xff]
        %v497 = vld [vmem:[#allocation5 + $0x38] sm:$0xf]
        %v498 = vld [vmem:[#allocation5 + $0x3c] sm:$0xff]
        %v499 = vld [vmem:[#allocation5 + $0x44] sm:$0xf]
        %v500 = vld [vmem:[#allocation5 + $0x48] sm:$0xff]
        %v501 = vld [vmem:[#allocation5 + $0x50] sm:$0xf]
        %v502 = vld [vmem:[#allocation5 + $0x54] sm:$0xff]
        %v503 = vld [vmem:[#allocation5 + $0x5c] sm:$0xf]
        %v504 = vld [vmem:[#allocation5 + $0x60] sm:$0xff]
        %v505 = vld [vmem:[#allocation5 + $0x68] sm:$0xf]
        %v506 = vld [vmem:[#allocation5 + $0x6c] sm:$0xff]
        %v507 = vld [vmem:[#allocation5 + $0x74] sm:$0xf]
        %v508 = vld [vmem:[#allocation5 + $0x78] sm:$0xff]
        %v509 = vld [vmem:[#allocation5 + $0x80] sm:$0xf]
        %v510 = vld [vmem:[#allocation5 + $0x84] sm:$0xff]
        %v511 = vld [vmem:[#allocation5 + $0x8c] sm:$0xf]
        %v512 = vld [vmem:[#allocation5 + $0x90] sm:$0xff]
        %v513 = vld [vmem:[#allocation5 + $0x98] sm:$0xf]
        %v514 = vld [vmem:[#allocation5 + $0x9c] sm:$0xff]
        %v515 = vld [vmem:[#allocation5 + $0xa4] sm:$0xf]
        %v516 = vld [vmem:[#allocation5 + $0xa8] sm:$0xff]
        %v517 = vld [vmem:[#allocation5 + $0xb0] sm:$0xf]
        %v518 = vld [vmem:[#allocation5 + $0xb4] sm:$0xff]
        %v519 = vld [vmem:[#allocation5 + $0xbc] sm:$0xf]
        %v520 = vld [vmem:[%s4] sm:$0x7]
        %v522 = vlaneseq
        %v523 = vshrl.u32 %v522, 7
        %v524 = vsub.s32 0, %v523
        %v525 = vrot.slane %v520, %v524
        %v526 = vlaneseq
        %v527 = vshrl.u32 %v526, 7
        %v528 = vsub.s32 1, %v527
        %v529 = vrot.slane %v520, %v528
        %v530 = vlaneseq
        %v531 = vshrl.u32 %v530, 7
        %v532 = vsub.s32 2, %v531
        %v533 = vrot.slane %v520, %v532
        %v569 = vunpack.c.l.b16 %v488
        %v570 = vunpack.c.h.b16 %v488
        %v571 = vunpack.c.l.b16 %v489
        %v572 = vunpack.c.l.b16 %v490
        %v573 = vunpack.c.h.b16 %v490
        %v574 = vunpack.c.l.b16 %v491
        %v575 = vunpack.c.l.b16 %v492
        %v576 = vunpack.c.h.b16 %v492
        %v577 = vunpack.c.l.b16 %v493
        %v578 = vunpack.c.l.b16 %v494
        %v579 = vunpack.c.h.b16 %v494
        %v580 = vunpack.c.l.b16 %v495
        %v581 = vunpack.c.l.b16 %v496
        %v582 = vunpack.c.h.b16 %v496
        %v583 = vunpack.c.l.b16 %v497
        %v584 = vunpack.c.l.b16 %v498
        %v585 = vunpack.c.h.b16 %v498
        %v586 = vunpack.c.l.b16 %v499
        %v587 = vunpack.c.l.b16 %v500
        %v588 = vunpack.c.h.b16 %v500
        %v589 = vunpack.c.l.b16 %v501
        %v590 = vunpack.c.l.b16 %v502
        %v591 = vunpack.c.h.b16 %v502
        %v592 = vunpack.c.l.b16 %v503
        %v593 = vunpack.c.l.b16 %v504
        %v594 = vunpack.c.h.b16 %v504
        %v595 = vunpack.c.l.b16 %v505
        %v596 = vunpack.c.l.b16 %v506
        %v597 = vunpack.c.h.b16 %v506
        %v598 = vunpack.c.l.b16 %v507
        %v599 = vunpack.c.l.b16 %v508
        %v600 = vunpack.c.h.b16 %v508
        %v601 = vunpack.c.l.b16 %v509
        %v602 = vunpack.c.l.b16 %v510
        %v603 = vunpack.c.h.b16 %v510
        %v604 = vunpack.c.l.b16 %v511
        %v605 = vunpack.c.l.b16 %v512
        %v606 = vunpack.c.h.b16 %v512
        %v607 = vunpack.c.l.b16 %v513
        %v608 = vunpack.c.l.b16 %v514
        %v609 = vunpack.c.h.b16 %v514
        %v610 = vunpack.c.l.b16 %v515
        %v611 = vunpack.c.l.b16 %v516
        %v612 = vunpack.c.h.b16 %v516
        %v613 = vunpack.c.l.b16 %v517
        %v614 = vunpack.c.l.b16 %v518
        %v615 = vunpack.c.h.b16 %v518
        %v616 = vunpack.c.l.b16 %v519
        %v617 = vpack.c.b16 %v572, %v569
        %v618 = vpack.c.b16 %v573, %v570
        %v619 = vpack.c.b16 %v574, %v571
        %v620 = vpack.c.b16 %v578, %v575
        %v621 = vpack.c.b16 %v579, %v576
        %v622 = vpack.c.b16 %v580, %v577
        %v623 = vpack.c.b16 %v584, %v581
        %v624 = vpack.c.b16 %v585, %v582
        %v625 = vpack.c.b16 %v586, %v583
        %v626 = vpack.c.b16 %v590, %v587
        %v627 = vpack.c.b16 %v591, %v588
        %v628 = vpack.c.b16 %v592, %v589
        %v629 = vpack.c.b16 %v596, %v593
        %v630 = vpack.c.b16 %v597, %v594
        %v631 = vpack.c.b16 %v598, %v595
        %v632 = vpack.c.b16 %v602, %v599
        %v633 = vpack.c.b16 %v603, %v600
        %v634 = vpack.c.b16 %v604, %v601
        %v635 = vpack.c.b16 %v608, %v605
        %v636 = vpack.c.b16 %v609, %v606
        %v637 = vpack.c.b16 %v610, %v607
        %v638 = vpack.c.b16 %v614, %v611
        %v639 = vpack.c.b16 %v615, %v612
        %v640 = vpack.c.b16 %v616, %v613
        %665 = vmatprep.subr.bf16.mxu0 %v639
        %666 = vmatpush1.bf16.msra.mxu0 %v638
        %667 = vmatprep.subr.bf16.mxu0 %v636
        %668 = vmatpush1.bf16.msra.mxu0 %v635
        %669 = vmatprep.subr.bf16.mxu0 %v633
        %670 = vmatpush1.bf16.msra.mxu0 %v632
        %671 = vmatprep.subr.bf16.mxu0 %v630
        %672 = vmatpush1.bf16.msra.mxu0 %v629
        %673 = vmatprep.subr.bf16.mxu0 %v627
        %674 = vmatpush1.bf16.msra.mxu0 %v626
        %675 = vmatprep.subr.bf16.mxu0 %v624
        %676 = vmatpush1.bf16.msra.mxu0 %v623
        %677 = vmatprep.subr.bf16.mxu0 %v621
        %678 = vmatpush1.bf16.msra.mxu0 %v620
        %679 = vmatprep.subr.bf16.mxu0 %v618
        %680 = vmatpush1.bf16.msra.mxu0 %v617
        %681 = vmatprep.subr.bf16.mxu0 0
        %682 = vmatpush2.bf16.msra.mxu0 0
        %683 = vmatprep.subr.bf16.mxu0 0
        %684 = vmatpush2.bf16.msra.mxu0 0
        %685 = vmatprep.subr.bf16.mxu0 0
        %686 = vmatpush2.bf16.msra.mxu0 0
        %687 = vmatprep.subr.bf16.mxu0 0
        %688 = vmatpush2.bf16.msra.mxu0 0
        %689 = vmatprep.subr.bf16.mxu0 0
        %690 = vmatpush2.bf16.msra.mxu0 0
        %691 = vmatprep.subr.bf16.mxu0 0
        %692 = vmatpush2.bf16.msra.mxu0 0
        %693 = vmatprep.subr.bf16.mxu0 0
        %694 = vmatpush2.bf16.msra.mxu0 0
        %695 = vmatprep.subr.bf16.mxu0 0
        %696 = vmatpush2.bf16.msra.mxu0 0
        %697 = vmatprep.mubr.bf16.mxu0 0
        %698 = vmatmul.mubr.bf16.gmra.mxu0 %v484
        %v699 = vpop.f32.mrf.mxu0
        %v700 = vadd.f32 %v525, %v699
        %v701 = vpop.f32.mrf.mxu0
        %v702 = vadd.f32 %v529, %v701
        %v703 = vpop.f32.mrf.mxu0
        %v704 = vadd.f32 %v525, %v703
        %v705 = vpop.f32.mrf.mxu0
        %v706 = vadd.f32 %v529, %v705
        %707 = vmatprep.mubr.bf16.mxu0 0
        %708 = vmatmul.mubr.bf16.gmra.mxu0 %v485
        %v709 = vpop.f32.mrf.mxu0
        %v710 = vadd.f32 %v525, %v709
        %v711 = vpop.f32.mrf.mxu0
        %v712 = vadd.f32 %v529, %v711
        %v713 = vpop.f32.mrf.mxu0
        %v714 = vadd.f32 %v525, %v713
        %v715 = vpop.f32.mrf.mxu0
        %v716 = vadd.f32 %v529, %v715
        %717 = vmatprep.mubr.bf16.mxu0 0
        %718 = vmatmul.mubr.bf16.gmra.mxu0 %v486
        %v719 = vpop.f32.mrf.mxu0
        %v720 = vadd.f32 %v525, %v719
        %v721 = vpop.f32.mrf.mxu0
        %v722 = vadd.f32 %v529, %v721
        %v723 = vpop.f32.mrf.mxu0
        %v724 = vadd.f32 %v525, %v723
        %v725 = vpop.f32.mrf.mxu0
        %v726 = vadd.f32 %v529, %v725
        %727 = vmatprep.mubr.bf16.mxu0 0
        %728 = vmatmul.mubr.bf16.gmra.mxu0 %v487
        %v729 = vpop.f32.mrf.mxu0
        %v730 = vadd.f32 %v525, %v729
        %v731 = vpop.f32.mrf.mxu0
        %v732 = vadd.f32 %v529, %v731
        %v733 = vpop.f32.mrf.mxu0
        %v734 = vadd.f32 %v525, %v733
        %v735 = vpop.f32.mrf.mxu0
        %v736 = vadd.f32 %v529, %v735
        %737 = vdwg.mxu0
        %738 = vmatprep.subr.bf16.mxu0 0
        %739 = vmatpush1.bf16.msra.mxu0 %v640
        %740 = vmatprep.subr.bf16.mxu0 0
        %741 = vmatpush1.bf16.msra.mxu0 %v637
        %742 = vmatprep.subr.bf16.mxu0 0
        %743 = vmatpush1.bf16.msra.mxu0 %v634
        %744 = vmatprep.subr.bf16.mxu0 0
        %745 = vmatpush1.bf16.msra.mxu0 %v631
        %746 = vmatprep.subr.bf16.mxu0 0
        %747 = vmatpush1.bf16.msra.mxu0 %v628
        %748 = vmatprep.subr.bf16.mxu0 0
        %749 = vmatpush1.bf16.msra.mxu0 %v625
        %750 = vmatprep.subr.bf16.mxu0 0
        %751 = vmatpush1.bf16.msra.mxu0 %v622
        %752 = vmatprep.subr.bf16.mxu0 0
        %753 = vmatpush1.bf16.msra.mxu0 %v619
        %754 = vmatprep.subr.bf16.mxu0 0
        %755 = vmatpush2.bf16.msra.mxu0 0
        %756 = vmatprep.subr.bf16.mxu0 0
        %757 = vmatpush2.bf16.msra.mxu0 0
        %758 = vmatprep.subr.bf16.mxu0 0
        %759 = vmatpush2.bf16.msra.mxu0 0
        %760 = vmatprep.subr.bf16.mxu0 0
        %761 = vmatpush2.bf16.msra.mxu0 0
        %762 = vmatprep.subr.bf16.mxu0 0
        %763 = vmatpush2.bf16.msra.mxu0 0
        %764 = vmatprep.subr.bf16.mxu0 0
        %765 = vmatpush2.bf16.msra.mxu0 0
        %766 = vmatprep.subr.bf16.mxu0 0
        %767 = vmatpush2.bf16.msra.mxu0 0
        %768 = vmatprep.subr.bf16.mxu0 0
        %769 = vmatpush2.bf16.msra.mxu0 0
        %770 = vmatprep.mubr.bf16.mxu0 0
        %771 = vmatmul.mubr.bf16.gmra.mxu0 %v484
        %v772 = vpop.f32.mrf.mxu0
        %v773 = vadd.f32 %v533, %v772
        %v774 = vpop.f32.mrf.mxu0
        %v775 = vpop.f32.mrf.mxu0
        %v776 = vadd.f32 %v533, %v775
        %v777 = vpop.f32.mrf.mxu0
        %778 = vmatprep.mubr.bf16.mxu0 0
        %779 = vmatmul.mubr.bf16.gmra.mxu0 %v485
        %v780 = vpop.f32.mrf.mxu0
        %v781 = vadd.f32 %v533, %v780
        %v782 = vpop.f32.mrf.mxu0
        %v783 = vpop.f32.mrf.mxu0
        %v784 = vadd.f32 %v533, %v783
        %v785 = vpop.f32.mrf.mxu0
        %786 = vmatprep.mubr.bf16.mxu0 0
        %787 = vmatmul.mubr.bf16.gmra.mxu0 %v486
        %v788 = vpop.f32.mrf.mxu0
        %v789 = vadd.f32 %v533, %v788
        %v790 = vpop.f32.mrf.mxu0
        %v791 = vpop.f32.mrf.mxu0
        %v792 = vadd.f32 %v533, %v791
        %v793 = vpop.f32.mrf.mxu0
        %794 = vmatprep.mubr.bf16.mxu0 0
        %795 = vmatmul.mubr.bf16.gmra.mxu0 %v487
        %v796 = vpop.f32.mrf.mxu0
        %v797 = vadd.f32 %v533, %v796
        %v798 = vpop.f32.mrf.mxu0
        %v799 = vpop.f32.mrf.mxu0
        %v800 = vadd.f32 %v533, %v799
        %v801 = vpop.f32.mrf.mxu0
        %802 = vdwg.mxu0
        %v803 = vpack.c.bf16 %v704, %v700
        %v804 = vpack.c.bf16 %v714, %v710
        %v805 = vpack.c.bf16 %v724, %v720
        %v806 = vpack.c.bf16 %v734, %v730
        %v811 = vunpack.c.l.b16 %v803
        %v812 = vunpack.c.h.b16 %v803
        %v813 = vunpack.c.l.b16 %v804
        %v814 = vunpack.c.h.b16 %v804
        %v815 = vunpack.c.l.b16 %v805
        %v816 = vunpack.c.h.b16 %v805
        %v817 = vunpack.c.l.b16 %v806
        %v818 = vunpack.c.h.b16 %v806
        %v819 = vpack.c.b16 %v811, %v811
        %v820 = vpack.c.b16 %v812, %v812
        %v821 = vpack.c.b16 %v813, %v813
        %v822 = vpack.c.b16 %v814, %v814
        %v823 = vpack.c.b16 %v815, %v815
        %v824 = vpack.c.b16 %v816, %v816
        %v825 = vpack.c.b16 %v817, %v817
        %v826 = vpack.c.b16 %v818, %v818
        %835 = vst [vmem:[%s337] sm:$0xf] %v819
        %836 = vst [vmem:[%s337 + $0x4] sm:$0xf] %v820
        %837 = vst [vmem:[%s337 + $0x8] sm:$0xf] %v821
        %838 = vst [vmem:[%s337 + $0xc] sm:$0xf] %v822
        %839 = vst [vmem:[%s337 + $0x10] sm:$0xf] %v823
        %840 = vst [vmem:[%s337 + $0x14] sm:$0xf] %v824
        %841 = vst [vmem:[%s337 + $0x18] sm:$0xf] %v825
        %842 = vst [vmem:[%s337 + $0x1c] sm:$0xf] %v826
        %v843 = vpack.c.bf16 %v706, %v702
        %v844 = vpack.c.bf16 %v716, %v712
        %v845 = vpack.c.bf16 %v726, %v722
        %v846 = vpack.c.bf16 %v736, %v732
        %v851 = vunpack.c.l.b16 %v843
        %v852 = vunpack.c.h.b16 %v843
        %v853 = vunpack.c.l.b16 %v844
        %v854 = vunpack.c.h.b16 %v844
        %v855 = vunpack.c.l.b16 %v845
        %v856 = vunpack.c.h.b16 %v845
        %v857 = vunpack.c.l.b16 %v846
        %v858 = vunpack.c.h.b16 %v846
        %v859 = vpack.c.b16 %v851, %v851
        %v860 = vpack.c.b16 %v852, %v852
        %v861 = vpack.c.b16 %v853, %v853
        %v862 = vpack.c.b16 %v854, %v854
        %v863 = vpack.c.b16 %v855, %v855
        %v864 = vpack.c.b16 %v856, %v856
        %v865 = vpack.c.b16 %v857, %v857
        %v866 = vpack.c.b16 %v858, %v858
        %875 = vst [vmem:[%s344] sm:$0xf] %v859
        %876 = vst [vmem:[%s344 + $0x4] sm:$0xf] %v860
        %877 = vst [vmem:[%s344 + $0x8] sm:$0xf] %v861
        %878 = vst [vmem:[%s344 + $0xc] sm:$0xf] %v862
        %879 = vst [vmem:[%s344 + $0x10] sm:$0xf] %v863
        %880 = vst [vmem:[%s344 + $0x14] sm:$0xf] %v864
        %881 = vst [vmem:[%s344 + $0x18] sm:$0xf] %v865
        %882 = vst [vmem:[%s344 + $0x1c] sm:$0xf] %v866
        %v883 = vpack.c.bf16 %v776, %v773
        %v884 = vpack.c.bf16 %v784, %v781
        %v885 = vpack.c.bf16 %v792, %v789
        %v886 = vpack.c.bf16 %v800, %v797
        %v891 = vunpack.c.l.b16 %v883
        %v892 = vunpack.c.h.b16 %v883
        %v893 = vunpack.c.l.b16 %v884
        %v894 = vunpack.c.h.b16 %v884
        %v895 = vunpack.c.l.b16 %v885
        %v896 = vunpack.c.h.b16 %v885
        %v897 = vunpack.c.l.b16 %v886
        %v898 = vunpack.c.h.b16 %v886
        %v899 = vpack.c.b16 %v891, %v891
        %v900 = vpack.c.b16 %v892, %v892
        %v901 = vpack.c.b16 %v893, %v893
        %v902 = vpack.c.b16 %v894, %v894
        %v903 = vpack.c.b16 %v895, %v895
        %v904 = vpack.c.b16 %v896, %v896
        %v905 = vpack.c.b16 %v897, %v897
        %v906 = vpack.c.b16 %v898, %v898
        %915 = vst [vmem:[%s351] sm:$0xf] %v899
        %916 = vst [vmem:[%s351 + $0x4] sm:$0xf] %v900
        %917 = vst [vmem:[%s351 + $0x8] sm:$0xf] %v901
        %918 = vst [vmem:[%s351 + $0xc] sm:$0xf] %v902
        %919 = vst [vmem:[%s351 + $0x10] sm:$0xf] %v903
        %920 = vst [vmem:[%s351 + $0x14] sm:$0xf] %v904
        %921 = vst [vmem:[%s351 + $0x18] sm:$0xf] %v905
        %922 = vst [vmem:[%s351 + $0x1c] sm:$0xf] %v906
        %s923 = sand.u32 %s163, 1
        %s924 = scalar_lea.sflag [#allocation4], %s923
        %s925 = sand.u32 %s163, 1
        %s926 = smul.addr %s925, 32
        %s927 = scalar_lea.vmem [#allocation7], %s926
        %s928 = sand.u32 %s29, 1
        %s929 = scalar_lea.sflag [#allocation9], %s928
        %s930 = sand.u32 %s191, 1
        %s931 = smul.addr %s930, 32
        %s932 = scalar_lea.vmem [#allocation8], %s931
        %s933 = sand.u32 %s29, 1
        %s934 = scalar_lea.sflag [#allocation9], %s933
        %s935 = sand.u32 %s219, 1
        %s936 = smul.addr %s935, 32
        %s937 = scalar_lea.vmem [#allocation10], %s936
        // Predicated region
        $region49: #{tpu_custom_call.1} parent=39 // pred_check
          %p938 = pneg %p173
        $region50: #{tpu_custom_call.1} parent=39 // pred_check_branch
          %940 = sbr.rel (%p938) target = $region52
        $region51: #{tpu_custom_call.1} parent=39 // pred_region
          %s941 = smul.u32 8, %s34
          %s943 = ssub.s32 512, 512
          %944 = vsyncadd %s924, %s943
          %s945 = smul.addr %s33, 16
          %s946 = sadd.s32 %s941, %s945
          %s947 = smul.addr %s946, 64
          %s948 = scalar_lea.hbm %s5, %s947
          %s949 = sshll.u32 %s927, 4
          %s950 = int_to_ptr.vmem [resolvable:$true] %s949
          %955 = dma.vmem_to_hbm [thread:$0]  %s950, 512, %s948, %s924, 64, 64, 4
        $region52: #{tpu_custom_call.1} parent=39 // pred_fallthru
          _
        // Predicated region
        $region53: #{tpu_custom_call.1} parent=39 // pred_check
          %p956 = pneg %p201
        $region54: #{tpu_custom_call.1} parent=39 // pred_check_branch
          %958 = sbr.rel (%p956) target = $region56
        $region55: #{tpu_custom_call.1} parent=39 // pred_region
          %s959 = smul.u32 8, %s34
          %s961 = ssub.s32 512, 512
          %962 = vsyncadd %s929, %s961
          %s963 = smul.addr %s33, 16
          %s964 = sadd.s32 %s959, %s963
          %s965 = smul.addr %s964, 64
          %s966 = scalar_lea.hbm %s6, %s965
          %s967 = sshll.u32 %s932, 4
          %s968 = int_to_ptr.vmem [resolvable:$true] %s967
          %973 = dma.vmem_to_hbm [thread:$0]  %s968, 512, %s966, %s929, 64, 64, 4
        $region56: #{tpu_custom_call.1} parent=39 // pred_fallthru
          _
        // Predicated region
        $region57: #{tpu_custom_call.1} parent=39 // pred_check
          %p974 = pneg %p229
        $region58: #{tpu_custom_call.1} parent=39 // pred_check_branch
          %976 = sbr.rel (%p974) target = $region60
        $region59: #{tpu_custom_call.1} parent=39 // pred_region
          %s977 = smul.u32 8, %s34
          %s979 = ssub.s32 512, 512
          %980 = vsyncadd %s934, %s979
          %s981 = smul.addr %s33, 16
          %s982 = sadd.s32 %s977, %s981
          %s983 = smul.addr %s982, 64
          %s984 = scalar_lea.hbm %s7, %s983
          %s985 = sshll.u32 %s937, 4
          %s986 = int_to_ptr.vmem [resolvable:$true] %s985
          %991 = dma.vmem_to_hbm [thread:$0]  %s986, 512, %s984, %s934, 64, 64, 4
        $region60: #{tpu_custom_call.1} parent=39 // pred_fallthru
          _
      $region40: #{tpu_custom_call.1} parent=5 // pred_fallthru
        _
      %p992 = scmp.le.s32.totalorder 2, %s24
      // Predicated region
      $region61: #{tpu_custom_call.1} parent=5 // pred_check
        %p993 = pneg %p992
      $region62: #{tpu_custom_call.1} parent=5 // pred_check_branch
        %995 = sbr.rel (%p993) target = $region64
      $region63: #{tpu_custom_call.1} parent=5 // pred_region
        %s996 = ssub.s32 %s24, 2
        // Predicated region
        $region65: #{tpu_custom_call.1} parent=63 // pred_check
          %p997 = pneg %p179
        $region66: #{tpu_custom_call.1} parent=63 // pred_check_branch
          %999 = sbr.rel (%p997) target = $region68
        $region67: #{tpu_custom_call.1} parent=63 // pred_region
          %s1000 = sand.u32 %s164, 1
          %s1001 = scalar_lea.sflag [#allocation4], %s1000
          %s1002 = sand.u32 %s164, 1
          %s1003 = smul.addr %s1002, 32
          %s1004 = scalar_lea.vmem [#allocation7], %s1003
          %1005 = dma.done %s1001, 512
        $region68: #{tpu_custom_call.1} parent=63 // pred_fallthru
          _
        // Predicated region
        $region69: #{tpu_custom_call.1} parent=63 // pred_check
          %p1006 = pneg %p207
        $region70: #{tpu_custom_call.1} parent=63 // pred_check_branch
          %1008 = sbr.rel (%p1006) target = $region72
        $region71: #{tpu_custom_call.1} parent=63 // pred_region
          %s1009 = sand.u32 %s30, 1
          %s1010 = scalar_lea.sflag [#allocation9], %s1009
          %s1011 = sand.u32 %s192, 1
          %s1012 = smul.addr %s1011, 32
          %s1013 = scalar_lea.vmem [#allocation8], %s1012
          %1014 = dma.done %s1010, 512
        $region72: #{tpu_custom_call.1} parent=63 // pred_fallthru
          _
        // Predicated region
        $region73: #{tpu_custom_call.1} parent=63 // pred_check
          %p1015 = pneg %p235
        $region74: #{tpu_custom_call.1} parent=63 // pred_check_branch
          %1017 = sbr.rel (%p1015) target = $region76
        $region75: #{tpu_custom_call.1} parent=63 // pred_region
          %s1018 = sand.u32 %s30, 1
          %s1019 = scalar_lea.sflag [#allocation9], %s1018
          %s1020 = sand.u32 %s220, 1
          %s1021 = smul.addr %s1020, 32
          %s1022 = scalar_lea.vmem [#allocation10], %s1021
          %1023 = dma.done %s1019, 512
        $region76: #{tpu_custom_call.1} parent=63 // pred_fallthru
          _
      $region64: #{tpu_custom_call.1} parent=5 // pred_fallthru
        _
    $region6: #{tpu_custom_call.1} parent=1 // loop_footer
      %s28 = sadd.s32 1, %s24
    $region7: #{tpu_custom_call.1} parent=1 // loop_footer_branch
      %23 = sbr.rel target = $region3
    $region8: #{tpu_custom_call.1} parent=1 // loop_exit
      _
    %1024 = vsyncpa [#allocation3], 1
    %s1025 = scalar_lea.sflag [#allocation3], 1
    %1026 = vsyncpa %s1025, 1
    %1027 = vsyncpa [#allocation6], 1
    %1028 = vsyncpa [#allocation4], 1
    %s1029 = scalar_lea.sflag [#allocation4], 1
    %1030 = vsyncpa %s1029, 1
    %1031 = vsyncpa [#allocation9], 1
    %s1032 = scalar_lea.sflag [#allocation9], 1
    %1033 = vsyncpa %s1032, 1

</llo_original>
